<compile_context>
chip_gen: v7x
topology: tpu7x:2x2x1
jax: 0.10.0
libtpu: 0.0.40
codegen_flags: <defaults>
</compile_context>

<pallas_src>
import math
from functools import partial

import numpy as np
import jax
import jax.numpy as jnp
from jax import lax
from jax.experimental import pallas as pl
from jax.experimental.pallas import tpu as pltpu


def _local_attn_kernel(x_ref, wqkv_ref, wout_ref, bias_ref, hsum_ref,
                       expand_ref, colsum_ref, o_ref, *,
                       heads, key_size, k_size, seq_len):
    """One grid step: TBN whole locations (rows = TBN*seq_len), all heads at once."""
    HK = heads * key_size
    R = x_ref.shape[0]
    p_right = (k_size - 1) // 2
    p_left = k_size - 1 - p_right

    # ---- fused QKV projection: bf16 inputs, f32 accumulation on the MXU ---------
    x = x_ref[...]                                                     # [R, D] bf16
    qkv = jnp.dot(x, wqkv_ref[...],
                  preferred_element_type=jnp.float32)                  # [R, 3*HK] f32
    q = qkv[:, :HK]                       # q-scale (1/sqrt(key_size)) folded into wqkv
    kv = qkv[:, HK:]                      # packed K|V -> one shift per window offset

    # per-row sequence index inside its location (blocks hold whole locations)
    s_idx = lax.broadcasted_iota(jnp.int32, (R, 1), 0) % seq_len       # [R, 1]

    def shift_rows(t, delta):
        # t[r + delta]; zero-filled where r + delta falls outside the block.
        if delta == 0:
            return t
        pad = jnp.zeros((abs(delta), t.shape[1]), t.dtype)
        if delta > 0:
            return jnp.concatenate([t[delta:, :], pad], axis=0)
        return jnp.concatenate([pad, t[: t.shape[0] + delta, :]], axis=0)

    # ---- shifted K / V, one shift per window offset (K and V packed) -------------
    k_parts, v_parts = [], []
    for w in range(k_size):
        delta = w - p_left
        kv_w = shift_rows(kv, delta)
        if delta != 0:
            sp = s_idx + delta
            mask = jnp.logical_and(sp >= 0, sp < seq_len).astype(kv_w.dtype)
            kv_w = kv_w * mask            # zero outside the location's sequence
        k_parts.append(kv_w[:, :HK])
        v_parts.append(kv_w[:, HK:])
    k_cat = jnp.concatenate(k_parts, axis=1)                           # [R, W*HK]
    v_cat = jnp.concatenate(v_parts, axis=1)                           # [R, W*HK]
    q_cat = jnp.concatenate([q] * k_size, axis=1)                      # [R, W*HK]

    # ---- all (window, head) scores with ONE matmul: [R, W*HK] @ [W*HK, W*H] ------
    scores = jnp.dot(q_cat * k_cat, hsum_ref[...],
                     preferred_element_type=jnp.float32)               # [R, W*H]
    scores = scores + bias_ref[...]       # bias also applies to zero-padded slots

    # ---- lane-dense softmax over the window axis ---------------------------------
    # Per-row max: constant across the window axis for every head, so the softmax
    # result is identical to the reference's per-head max subtraction, and it is
    # >= the per-head max so exp() never overflows.
    m = jnp.max(scores, axis=1, keepdims=True)                         # [R, 1]
    p = jnp.exp(scores - m)                                            # [R, W*H]

    # ---- expand probs to channels, weight V, reduce over the window (MXU) --------
    p_exp = jnp.dot(p, expand_ref[...],
                    preferred_element_type=jnp.float32)                # [R, W*HK]
    acc = jnp.dot(p_exp * v_cat, colsum_ref[...],
                  preferred_element_type=jnp.float32)                  # [R, HK]
    den = jnp.dot(p_exp, colsum_ref[...],
                  preferred_element_type=jnp.float32)                  # [R, HK]
    res = acc / den                                                    # exact divide

    # ---- output projection --------------------------------------------------------
    o_ref[...] = jnp.dot(res.astype(jnp.bfloat16), wout_ref[...],
                         preferred_element_type=jnp.float32)           # [R, D] f32


def local_self_attention_opt(x, pos_bias, w_qkv, w_out, *, heads, key_size,
                             neighbors, target_rows=1024):
    B, HW, S, D = x.shape
    k_size = 1 + 2 * neighbors
    HK = heads * key_size
    BN = B * HW

    # ---- choose locations-per-block (TBN) -----------------------------------------
    tbn = max(1, min(BN, max(1, target_rows // max(S, 1))))
    if BN > 1 and -(-BN // tbn) < 2:        # aim for >= 2 grid steps (2 TCs on v7x)
        tbn = max(1, -(-BN // 2))
    g = 16 // math.gcd(16, S)               # rows must be a multiple of 16 (bf16 tile)
    tbn = -(-tbn // g) * g
    BN_pad = -(-BN // tbn) * tbn
    rows = tbn * S

    x2d = x.reshape(BN * S, D).astype(jnp.float32)
    if BN_pad != BN:
        x2d = jnp.pad(x2d, ((0, (BN_pad - BN) * S), (0, 0)))
    x2d = x2d.astype(jnp.bfloat16)          # halve DMA bytes of the streamed input

    # fused QKV weight (q-scale folded in) and output weight, bf16 for the MXU
    scale = 1.0 / math.sqrt(key_size)
    wqkv = jnp.concatenate([w_qkv[:, :HK] * scale, w_qkv[:, HK:]], axis=1)
    wqkv = wqkv.astype(jnp.bfloat16)                                   # [D, 3*HK]
    wout = w_out.astype(jnp.bfloat16)                                  # [HK, D]

    # per-row positional bias, column layout w*heads + h (grid-resident)
    bias_sw = jnp.transpose(pos_bias, (1, 2, 0)).reshape(S, k_size * heads)
    bias_rows = jnp.tile(bias_sw, (tbn, 1)).astype(jnp.float32)        # [rows, W*H]

    # constant structure matrices, hoisted out of the kernel (grid-resident)
    WH, WC = k_size * heads, k_size * HK
    rw = np.arange(WC) // HK
    rh = (np.arange(WC) % HK) // key_size
    cw = np.arange(WH) // heads
    ch = np.arange(WH) % heads
    hsum_np = ((rw[:, None] == cw[None, :]) &
               (rh[:, None] == ch[None, :])).astype(np.float32)        # [W*HK, W*H]
    hsum = jnp.asarray(hsum_np)
    expand = jnp.asarray(hsum_np.T)                                    # [W*H, W*HK]
    colsum = jnp.asarray(np.tile(np.eye(HK, dtype=np.float32),
                                 (k_size, 1)))                         # [W*HK, HK]

    kernel = partial(_local_attn_kernel, heads=heads, key_size=key_size,
                     k_size=k_size, seq_len=S)

    # Block footprint (streamed x/out double-buffered + grid-resident constants +
    # intermediates) is only a few MiB at rows~1024, well under the 32 MiB scoped
    # VMEM default on v5e/v6e/v7x, so the default limit is kept.
    out2d = pl.pallas_call(
        kernel,
        out_shape=jax.ShapeDtypeStruct((BN_pad * S, D), jnp.float32),
        grid=(BN_pad // tbn,),
        in_specs=[
            pl.BlockSpec((rows, D), lambda i: (i, 0)),                 # x rows (streamed)
            pl.BlockSpec((D, 3 * HK), lambda i: (0, 0)),               # fused QKV weight
            pl.BlockSpec((HK, D), lambda i: (0, 0)),                   # output weight
            pl.BlockSpec((rows, WH), lambda i: (0, 0)),                # per-row bias
            pl.BlockSpec((WC, WH), lambda i: (0, 0)),                  # head-sum matrix
            pl.BlockSpec((WH, WC), lambda i: (0, 0)),                  # head-expand matrix
            pl.BlockSpec((WC, HK), lambda i: (0, 0)),                  # window-sum matrix
        ],
        out_specs=pl.BlockSpec((rows, D), lambda i: (i, 0)),
        compiler_params=pltpu.CompilerParams(
            dimension_semantics=("parallel",)),
    )(x2d, wqkv, wout, bias_rows, hsum, expand, colsum)

    out2d = out2d[:BN * S]
    return out2d.reshape(B, HW, S, D)


def reference(x, pos_bias, w_qkv, w_out, *, heads, key_size, neighbors):
    """Pure-JAX (f32) transcription of the PyTorch forward, for verification."""
    B, HW, S, D = x.shape
    k_size = 1 + 2 * neighbors
    HK = heads * key_size
    qkv = x @ w_qkv
    q, k, v = qkv[..., :HK], qkv[..., HK:2 * HK], qkv[..., 2 * HK:]
    q = q / math.sqrt(key_size)
    q = q.reshape(B, HW, S, heads, key_size)
    k = k.reshape(B, HW, S, heads, key_size)
    v = v.reshape(B, HW, S, heads, key_size)
    p_right = (k_size - 1) // 2
    p_left = k_size - 1 - p_right
    pad = ((0, 0), (0, 0), (p_left, p_right), (0, 0), (0, 0))
    kp = jnp.pad(k, pad)
    vp = jnp.pad(v, pad)
    attn = jnp.stack(
        [jnp.einsum('bnhd,bnwhd->bnwh', q[:, :, i], kp[:, :, i:i + k_size])
         for i in range(S)], axis=2)                                   # [B,HW,S,W,H]
    bias = jnp.transpose(pos_bias, (1, 2, 0))[None, None]              # [1,1,S,W,H]
    attn = attn + bias
    attn = attn - jnp.max(attn, axis=-2, keepdims=True)
    attn = jax.nn.softmax(attn, axis=-2)
    res = jnp.stack(
        [jnp.einsum('bnwh,bnwhd->bnhd', attn[:, :, i], vp[:, :, i:i + k_size])
         for i in range(S)], axis=2)
    res = res.reshape(B, HW, S, HK)
    return res @ w_out


if __name__ == "__main__":
    # module hyper-params
    d_model, heads, size_per_head, neighbors = 32, 4, 8, 3
    key_size = size_per_head                    # key_size defaults to size_per_head
    k_size = 1 + 2 * neighbors                  # local window = 7
    B, HW, S = 2, 4, 8

    key = jax.random.PRNGKey(0)
    k1, k2, k3, k4 = jax.random.split(key, 4)
    x = jax.random.normal(k1, (B, HW, S, d_model), jnp.float32)
    pos_bias = 0.1 * jax.random.normal(k2, (heads, S, k_size), jnp.float32)
    # deterministic synthetic weights (stored transposed: x @ W)
    w_qkv = 0.1 * jax.random.normal(k3, (d_model, 3 * heads * key_size), jnp.float32)
    w_out = 0.1 * jax.random.normal(k4, (heads * key_size, d_model), jnp.float32)

    out = local_self_attention_opt(x, pos_bias, w_qkv, w_out,
                                   heads=heads, key_size=key_size,
                                   neighbors=neighbors)
    out = jax.block_until_ready(out)

    ref = reference(x, pos_bias, w_qkv, w_out,
                    heads=heads, key_size=key_size, neighbors=neighbors)
    assert out.shape == (B, HW, S, d_model)
    # bf16 MXU inputs (f32 accumulation) vs the all-f32 reference: worst-case ~1%
    # relative error on O(0.3) outputs, so 3e-2 is a comfortable but meaningful bound.
    err = float(np.max(np.abs(np.asarray(out) - np.asarray(ref))))
    assert np.allclose(np.asarray(out), np.asarray(ref), atol=3e-2, rtol=3e-2), err
    print("KERNEL_OK")
</pallas_src>

<mosaic_0001>
module attributes {stable_mosaic.version = 11 : i64} {
  func.func @_local_attn_kernel(%arg0: i32, %arg1: memref<32x32xbf16, #tpu.memory_space<vmem>>, %arg2: memref<32x96xbf16, #tpu.memory_space<vmem>>, %arg3: memref<32x32xbf16, #tpu.memory_space<vmem>>, %arg4: memref<32x28xf32, #tpu.memory_space<vmem>>, %arg5: memref<224x28xf32, #tpu.memory_space<vmem>>, %arg6: memref<28x224xf32, #tpu.memory_space<vmem>>, %arg7: memref<224x32xf32, #tpu.memory_space<vmem>>, %arg8: memref<32x32xf32, #tpu.memory_space<vmem>>) attributes {dimension_semantics = [#tpu.dimension_semantics<parallel>], iteration_bounds = array<i64: 2>, scalar_prefetch = 0 : i64, scratch_operands = 0 : i64, tpu.core_type = #tpu.core_type<tc>, window_params = [{transform_indices = @transform_0, window_bounds = array<i64: 32, 32>}, {pipeline_mode = #tpu.pipeline_mode<synchronous>, transform_indices = @transform_1, window_bounds = array<i64: 32, 96>}, {pipeline_mode = #tpu.pipeline_mode<synchronous>, transform_indices = @transform_2, window_bounds = array<i64: 32, 32>}, {pipeline_mode = #tpu.pipeline_mode<synchronous>, transform_indices = @transform_3, window_bounds = array<i64: 32, 28>}, {pipeline_mode = #tpu.pipeline_mode<synchronous>, transform_indices = @transform_4, window_bounds = array<i64: 224, 28>}, {pipeline_mode = #tpu.pipeline_mode<synchronous>, transform_indices = @transform_5, window_bounds = array<i64: 28, 224>}, {pipeline_mode = #tpu.pipeline_mode<synchronous>, transform_indices = @transform_6, window_bounds = array<i64: 224, 32>}, {transform_indices = @transform_7, window_bounds = array<i64: 32, 32>}]} {
    %c0 = arith.constant 0 : index
    %c0_0 = arith.constant 0 : index
    %0 = vector.load %arg1[%c0, %c0_0] : memref<32x32xbf16, #tpu.memory_space<vmem>>, vector<32x32xbf16>
    %c0_1 = arith.constant 0 : index
    %c0_2 = arith.constant 0 : index
    %1 = vector.load %arg2[%c0_1, %c0_2] : memref<32x96xbf16, #tpu.memory_space<vmem>>, vector<32x96xbf16>
    %cst = arith.constant dense<0.000000e+00> : vector<32x96xf32>
    %2 = tpu.matmul %0, %1, %cst {dimension_numbers = #tpu.dot_dimension_numbers<[1], [0], [0], [1], [0, 0, 1, 1], [], []>} : vector<32x32xbf16>, vector<32x96xbf16>, vector<32x96xf32> -> vector<32x96xf32>
    %3 = vector.extract_strided_slice %2 {offsets = [0, 0], sizes = [32, 32], strides = [1, 1]} : vector<32x96xf32> to vector<32x32xf32>
    %4 = vector.extract_strided_slice %2 {offsets = [0, 32], sizes = [32, 64], strides = [1, 1]} : vector<32x96xf32> to vector<32x64xf32>
    %5 = tpu.iota {dimensions = array<i32: 0>} : vector<32x1xi32>
    %c8_i32 = arith.constant 8 : i32
    %c0_i32 = arith.constant 0 : i32
    %6 = arith.cmpi eq, %c8_i32, %c0_i32 : i32
    %c1_i32 = arith.constant 1 : i32
    %7 = arith.select %6, %c1_i32, %c8_i32 : i32
    %8 = vector.broadcast %7 : i32 to vector<32x1xi32>
    %9 = arith.remsi %5, %8 : vector<32x1xi32>
    %c0_i32_3 = arith.constant 0 : i32
    %10 = vector.broadcast %c0_i32_3 : i32 to vector<32x1xi32>
    %11 = arith.cmpi ne, %9, %10 : vector<32x1xi32>
    %c0_i32_4 = arith.constant 0 : i32
    %12 = vector.broadcast %c0_i32_4 : i32 to vector<32x1xi32>
    %13 = arith.cmpi slt, %9, %12 : vector<32x1xi32>
    %c0_i32_5 = arith.constant 0 : i32
    %14 = arith.cmpi slt, %7, %c0_i32_5 : i32
    %15 = vector.broadcast %14 : i1 to vector<32x1xi1>
    %16 = vector.broadcast %15 : vector<32x1xi1> to vector<32x1xi1>
    %17 = arith.xori %13, %16 : vector<32x1xi1>
    %18 = arith.andi %17, %11 : vector<32x1xi1>
    %19 = vector.broadcast %7 : i32 to vector<32x1xi32>
    %20 = arith.addi %9, %19 : vector<32x1xi32>
    %21 = arith.select %18, %20, %9 : vector<32x1xi1>, vector<32x1xi32>
    %cst_6 = arith.constant 0.000000e+00 : f32
    %22 = vector.broadcast %cst_6 : f32 to vector<3x64xf32>
    %23 = vector.extract_strided_slice %4 {offsets = [0, 0], sizes = [29, 64], strides = [1, 1]} : vector<32x64xf32> to vector<29x64xf32>
    %24 = tpu.concatenate %22, %23 in 0 : vector<3x64xf32>, vector<29x64xf32> -> vector<32x64xf32>
    %c-3_i32 = arith.constant -3 : i32
    %25 = vector.broadcast %c-3_i32 : i32 to vector<32x1xi32>
    %26 = arith.addi %21, %25 : vector<32x1xi32>
    %c0_i32_7 = arith.constant 0 : i32
    %27 = vector.broadcast %c0_i32_7 : i32 to vector<32x1xi32>
    %28 = arith.cmpi sge, %26, %27 : vector<32x1xi32>
    %c8_i32_8 = arith.constant 8 : i32
    %29 = vector.broadcast %c8_i32_8 : i32 to vector<32x1xi32>
    %30 = arith.cmpi slt, %26, %29 : vector<32x1xi32>
    %31 = arith.andi %28, %30 : vector<32x1xi1>
    %32 = arith.extui %31 : vector<32x1xi1> to vector<32x1xi32>
    %33 = arith.sitofp %32 : vector<32x1xi32> to vector<32x1xf32>
    %34 = vector.broadcast %33 : vector<32x1xf32> to vector<32x64xf32>
    %35 = arith.mulf %24, %34 : vector<32x64xf32>
    %36 = vector.extract_strided_slice %35 {offsets = [0, 0], sizes = [32, 32], strides = [1, 1]} : vector<32x64xf32> to vector<32x32xf32>
    %37 = vector.extract_strided_slice %35 {offsets = [0, 32], sizes = [32, 32], strides = [1, 1]} : vector<32x64xf32> to vector<32x32xf32>
    %cst_9 = arith.constant 0.000000e+00 : f32
    %38 = vector.broadcast %cst_9 : f32 to vector<2x64xf32>
    %39 = vector.extract_strided_slice %4 {offsets = [0, 0], sizes = [30, 64], strides = [1, 1]} : vector<32x64xf32> to vector<30x64xf32>
    %40 = tpu.concatenate %38, %39 in 0 : vector<2x64xf32>, vector<30x64xf32> -> vector<32x64xf32>
    %c-2_i32 = arith.constant -2 : i32
    %41 = vector.broadcast %c-2_i32 : i32 to vector<32x1xi32>
    %42 = arith.addi %21, %41 : vector<32x1xi32>
    %c0_i32_10 = arith.constant 0 : i32
    %43 = vector.broadcast %c0_i32_10 : i32 to vector<32x1xi32>
    %44 = arith.cmpi sge, %42, %43 : vector<32x1xi32>
    %c8_i32_11 = arith.constant 8 : i32
    %45 = vector.broadcast %c8_i32_11 : i32 to vector<32x1xi32>
    %46 = arith.cmpi slt, %42, %45 : vector<32x1xi32>
    %47 = arith.andi %44, %46 : vector<32x1xi1>
    %48 = arith.extui %47 : vector<32x1xi1> to vector<32x1xi32>
    %49 = arith.sitofp %48 : vector<32x1xi32> to vector<32x1xf32>
    %50 = vector.broadcast %49 : vector<32x1xf32> to vector<32x64xf32>
    %51 = arith.mulf %40, %50 : vector<32x64xf32>
    %52 = vector.extract_strided_slice %51 {offsets = [0, 0], sizes = [32, 32], strides = [1, 1]} : vector<32x64xf32> to vector<32x32xf32>
    %53 = vector.extract_strided_slice %51 {offsets = [0, 32], sizes = [32, 32], strides = [1, 1]} : vector<32x64xf32> to vector<32x32xf32>
    %cst_12 = arith.constant 0.000000e+00 : f32
    %54 = vector.broadcast %cst_12 : f32 to vector<1x64xf32>
    %55 = vector.extract_strided_slice %4 {offsets = [0, 0], sizes = [31, 64], strides = [1, 1]} : vector<32x64xf32> to vector<31x64xf32>
    %56 = tpu.concatenate %54, %55 in 0 : vector<1x64xf32>, vector<31x64xf32> -> vector<32x64xf32>
    %c-1_i32 = arith.constant -1 : i32
    %57 = vector.broadcast %c-1_i32 : i32 to vector<32x1xi32>
    %58 = arith.addi %21, %57 : vector<32x1xi32>
    %c0_i32_13 = arith.constant 0 : i32
    %59 = vector.broadcast %c0_i32_13 : i32 to vector<32x1xi32>
    %60 = arith.cmpi sge, %58, %59 : vector<32x1xi32>
    %c8_i32_14 = arith.constant 8 : i32
    %61 = vector.broadcast %c8_i32_14 : i32 to vector<32x1xi32>
    %62 = arith.cmpi slt, %58, %61 : vector<32x1xi32>
    %63 = arith.andi %60, %62 : vector<32x1xi1>
    %64 = arith.extui %63 : vector<32x1xi1> to vector<32x1xi32>
    %65 = arith.sitofp %64 : vector<32x1xi32> to vector<32x1xf32>
    %66 = vector.broadcast %65 : vector<32x1xf32> to vector<32x64xf32>
    %67 = arith.mulf %56, %66 : vector<32x64xf32>
    %68 = vector.extract_strided_slice %67 {offsets = [0, 0], sizes = [32, 32], strides = [1, 1]} : vector<32x64xf32> to vector<32x32xf32>
    %69 = vector.extract_strided_slice %67 {offsets = [0, 32], sizes = [32, 32], strides = [1, 1]} : vector<32x64xf32> to vector<32x32xf32>
    %70 = vector.extract_strided_slice %4 {offsets = [0, 0], sizes = [32, 32], strides = [1, 1]} : vector<32x64xf32> to vector<32x32xf32>
    %71 = vector.extract_strided_slice %4 {offsets = [0, 32], sizes = [32, 32], strides = [1, 1]} : vector<32x64xf32> to vector<32x32xf32>
    %cst_15 = arith.constant 0.000000e+00 : f32
    %72 = vector.broadcast %cst_15 : f32 to vector<1x64xf32>
    %73 = vector.extract_strided_slice %4 {offsets = [1, 0], sizes = [31, 64], strides = [1, 1]} : vector<32x64xf32> to vector<31x64xf32>
    %74 = tpu.concatenate %73, %72 in 0 : vector<31x64xf32>, vector<1x64xf32> -> vector<32x64xf32>
    %c1_i32_16 = arith.constant 1 : i32
    %75 = vector.broadcast %c1_i32_16 : i32 to vector<32x1xi32>
    %76 = arith.addi %21, %75 : vector<32x1xi32>
    %c0_i32_17 = arith.constant 0 : i32
    %77 = vector.broadcast %c0_i32_17 : i32 to vector<32x1xi32>
    %78 = arith.cmpi sge, %76, %77 : vector<32x1xi32>
    %c8_i32_18 = arith.constant 8 : i32
    %79 = vector.broadcast %c8_i32_18 : i32 to vector<32x1xi32>
    %80 = arith.cmpi slt, %76, %79 : vector<32x1xi32>
    %81 = arith.andi %78, %80 : vector<32x1xi1>
    %82 = arith.extui %81 : vector<32x1xi1> to vector<32x1xi32>
    %83 = arith.sitofp %82 : vector<32x1xi32> to vector<32x1xf32>
    %84 = vector.broadcast %83 : vector<32x1xf32> to vector<32x64xf32>
    %85 = arith.mulf %74, %84 : vector<32x64xf32>
    %86 = vector.extract_strided_slice %85 {offsets = [0, 0], sizes = [32, 32], strides = [1, 1]} : vector<32x64xf32> to vector<32x32xf32>
    %87 = vector.extract_strided_slice %85 {offsets = [0, 32], sizes = [32, 32], strides = [1, 1]} : vector<32x64xf32> to vector<32x32xf32>
    %cst_19 = arith.constant 0.000000e+00 : f32
    %88 = vector.broadcast %cst_19 : f32 to vector<2x64xf32>
    %89 = vector.extract_strided_slice %4 {offsets = [2, 0], sizes = [30, 64], strides = [1, 1]} : vector<32x64xf32> to vector<30x64xf32>
    %90 = tpu.concatenate %89, %88 in 0 : vector<30x64xf32>, vector<2x64xf32> -> vector<32x64xf32>
    %c2_i32 = arith.constant 2 : i32
    %91 = vector.broadcast %c2_i32 : i32 to vector<32x1xi32>
    %92 = arith.addi %21, %91 : vector<32x1xi32>
    %c0_i32_20 = arith.constant 0 : i32
    %93 = vector.broadcast %c0_i32_20 : i32 to vector<32x1xi32>
    %94 = arith.cmpi sge, %92, %93 : vector<32x1xi32>
    %c8_i32_21 = arith.constant 8 : i32
    %95 = vector.broadcast %c8_i32_21 : i32 to vector<32x1xi32>
    %96 = arith.cmpi slt, %92, %95 : vector<32x1xi32>
    %97 = arith.andi %94, %96 : vector<32x1xi1>
    %98 = arith.extui %97 : vector<32x1xi1> to vector<32x1xi32>
    %99 = arith.sitofp %98 : vector<32x1xi32> to vector<32x1xf32>
    %100 = vector.broadcast %99 : vector<32x1xf32> to vector<32x64xf32>
    %101 = arith.mulf %90, %100 : vector<32x64xf32>
    %102 = vector.extract_strided_slice %101 {offsets = [0, 0], sizes = [32, 32], strides = [1, 1]} : vector<32x64xf32> to vector<32x32xf32>
    %103 = vector.extract_strided_slice %101 {offsets = [0, 32], sizes = [32, 32], strides = [1, 1]} : vector<32x64xf32> to vector<32x32xf32>
    %cst_22 = arith.constant 0.000000e+00 : f32
    %104 = vector.broadcast %cst_22 : f32 to vector<3x64xf32>
    %105 = vector.extract_strided_slice %4 {offsets = [3, 0], sizes = [29, 64], strides = [1, 1]} : vector<32x64xf32> to vector<29x64xf32>
    %106 = tpu.concatenate %105, %104 in 0 : vector<29x64xf32>, vector<3x64xf32> -> vector<32x64xf32>
    %c3_i32 = arith.constant 3 : i32
    %107 = vector.broadcast %c3_i32 : i32 to vector<32x1xi32>
    %108 = arith.addi %21, %107 : vector<32x1xi32>
    %c0_i32_23 = arith.constant 0 : i32
    %109 = vector.broadcast %c0_i32_23 : i32 to vector<32x1xi32>
    %110 = arith.cmpi sge, %108, %109 : vector<32x1xi32>
    %c8_i32_24 = arith.constant 8 : i32
    %111 = vector.broadcast %c8_i32_24 : i32 to vector<32x1xi32>
    %112 = arith.cmpi slt, %108, %111 : vector<32x1xi32>
    %113 = arith.andi %110, %112 : vector<32x1xi1>
    %114 = arith.extui %113 : vector<32x1xi1> to vector<32x1xi32>
    %115 = arith.sitofp %114 : vector<32x1xi32> to vector<32x1xf32>
    %116 = vector.broadcast %115 : vector<32x1xf32> to vector<32x64xf32>
    %117 = arith.mulf %106, %116 : vector<32x64xf32>
    %118 = vector.extract_strided_slice %117 {offsets = [0, 0], sizes = [32, 32], strides = [1, 1]} : vector<32x64xf32> to vector<32x32xf32>
    %119 = vector.extract_strided_slice %117 {offsets = [0, 32], sizes = [32, 32], strides = [1, 1]} : vector<32x64xf32> to vector<32x32xf32>
    %120 = tpu.concatenate %36, %52, %68, %70, %86, %102, %118 in 1 : vector<32x32xf32>, vector<32x32xf32>, vector<32x32xf32>, vector<32x32xf32>, vector<32x32xf32>, vector<32x32xf32>, vector<32x32xf32> -> vector<32x224xf32>
    %121 = tpu.concatenate %37, %53, %69, %71, %87, %103, %119 in 1 : vector<32x32xf32>, vector<32x32xf32>, vector<32x32xf32>, vector<32x32xf32>, vector<32x32xf32>, vector<32x32xf32>, vector<32x32xf32> -> vector<32x224xf32>
    %122 = tpu.concatenate %3, %3, %3, %3, %3, %3, %3 in 1 : vector<32x32xf32>, vector<32x32xf32>, vector<32x32xf32>, vector<32x32xf32>, vector<32x32xf32>, vector<32x32xf32>, vector<32x32xf32> -> vector<32x224xf32>
    %123 = arith.mulf %122, %120 : vector<32x224xf32>
    %c0_25 = arith.constant 0 : index
    %c0_26 = arith.constant 0 : index
    %124 = vector.load %arg5[%c0_25, %c0_26] : memref<224x28xf32, #tpu.memory_space<vmem>>, vector<224x28xf32>
    %cst_27 = arith.constant dense<0.000000e+00> : vector<32x28xf32>
    %125 = tpu.matmul %123, %124, %cst_27 {dimension_numbers = #tpu.dot_dimension_numbers<[1], [0], [0], [1], [0, 0, 1, 1], [], []>} : vector<32x224xf32>, vector<224x28xf32>, vector<32x28xf32> -> vector<32x28xf32>
    %c0_28 = arith.constant 0 : index
    %c0_29 = arith.constant 0 : index
    %126 = vector.load %arg4[%c0_28, %c0_29] : memref<32x28xf32, #tpu.memory_space<vmem>>, vector<32x28xf32>
    %127 = arith.addf %125, %126 : vector<32x28xf32>
    %cst_30 = arith.constant dense<0xFF800000> : vector<32xf32>
    %128 = vector.multi_reduction <maximumf>, %127, %cst_30 [1] : vector<32x28xf32> to vector<32xf32>
    %129 = vector.shape_cast %128 : vector<32xf32> to vector<32x1xf32>
    %130 = vector.broadcast %129 : vector<32x1xf32> to vector<32x28xf32>
    %131 = arith.subf %127, %130 : vector<32x28xf32>
    %132 = math.exp %131 : vector<32x28xf32>
    %c0_31 = arith.constant 0 : index
    %c0_32 = arith.constant 0 : index
    %133 = vector.load %arg6[%c0_31, %c0_32] : memref<28x224xf32, #tpu.memory_space<vmem>>, vector<28x224xf32>
    %cst_33 = arith.constant dense<0.000000e+00> : vector<32x224xf32>
    %134 = tpu.matmul %132, %133, %cst_33 {dimension_numbers = #tpu.dot_dimension_numbers<[1], [0], [0], [1], [0, 0, 1, 1], [], []>} : vector<32x28xf32>, vector<28x224xf32>, vector<32x224xf32> -> vector<32x224xf32>
    %135 = arith.mulf %134, %121 : vector<32x224xf32>
    %c0_34 = arith.constant 0 : index
    %c0_35 = arith.constant 0 : index
    %136 = vector.load %arg7[%c0_34, %c0_35] : memref<224x32xf32, #tpu.memory_space<vmem>>, vector<224x32xf32>
    %cst_36 = arith.constant dense<0.000000e+00> : vector<32x32xf32>
    %137 = tpu.matmul %135, %136, %cst_36 {dimension_numbers = #tpu.dot_dimension_numbers<[1], [0], [0], [1], [0, 0, 1, 1], [], []>} : vector<32x224xf32>, vector<224x32xf32>, vector<32x32xf32> -> vector<32x32xf32>
    %c0_37 = arith.constant 0 : index
    %c0_38 = arith.constant 0 : index
    %138 = vector.load %arg7[%c0_37, %c0_38] : memref<224x32xf32, #tpu.memory_space<vmem>>, vector<224x32xf32>
    %cst_39 = arith.constant dense<0.000000e+00> : vector<32x32xf32>
    %139 = tpu.matmul %134, %138, %cst_39 {dimension_numbers = #tpu.dot_dimension_numbers<[1], [0], [0], [1], [0, 0, 1, 1], [], []>} : vector<32x224xf32>, vector<224x32xf32>, vector<32x32xf32> -> vector<32x32xf32>
    %140 = arith.divf %137, %139 : vector<32x32xf32>
    %141 = arith.truncf %140 : vector<32x32xf32> to vector<32x32xbf16>
    %c0_40 = arith.constant 0 : index
    %c0_41 = arith.constant 0 : index
    %142 = vector.load %arg3[%c0_40, %c0_41] : memref<32x32xbf16, #tpu.memory_space<vmem>>, vector<32x32xbf16>
    %cst_42 = arith.constant dense<0.000000e+00> : vector<32x32xf32>
    %143 = tpu.matmul %141, %142, %cst_42 {dimension_numbers = #tpu.dot_dimension_numbers<[1], [0], [0], [1], [0, 0, 1, 1], [], []>} : vector<32x32xbf16>, vector<32x32xbf16>, vector<32x32xf32> -> vector<32x32xf32>
    %c0_43 = arith.constant 0 : index
    %c0_44 = arith.constant 0 : index
    %144 = vector.load %arg8[%c0_43, %c0_44] : memref<32x32xf32, #tpu.memory_space<vmem>>, vector<32x32xf32>
    tpu.vector_store %arg8[%c0_43, %c0_44], %143 {strides = array<i32>} : memref<32x32xf32, #tpu.memory_space<vmem>>, vector<32x32xf32>,
    return
  }
  func.func @transform_0(%arg0: i32) -> (i32, i32) {
    %c0_i32 = arith.constant 0 : i32
    %c0_i32_0 = arith.constant 0 : i32
    return %arg0, %c0_i32 : i32, i32
  }
  func.func @transform_1(%arg0: i32) -> (i32, i32) {
    %c0_i32 = arith.constant 0 : i32
    %c0_i32_0 = arith.constant 0 : i32
    %c0_i32_1 = arith.constant 0 : i32
    return %c0_i32, %c0_i32_0 : i32, i32
  }
  func.func @transform_2(%arg0: i32) -> (i32, i32) {
    %c0_i32 = arith.constant 0 : i32
    %c0_i32_0 = arith.constant 0 : i32
    %c0_i32_1 = arith.constant 0 : i32
    return %c0_i32, %c0_i32_0 : i32, i32
  }
  func.func @transform_3(%arg0: i32) -> (i32, i32) {
    %c0_i32 = arith.constant 0 : i32
    %c0_i32_0 = arith.constant 0 : i32
    %c0_i32_1 = arith.constant 0 : i32
    return %c0_i32, %c0_i32_0 : i32, i32
  }
  func.func @transform_4(%arg0: i32) -> (i32, i32) {
    %c0_i32 = arith.constant 0 : i32
    %c0_i32_0 = arith.constant 0 : i32
    %c0_i32_1 = arith.constant 0 : i32
    return %c0_i32, %c0_i32_0 : i32, i32
  }
  func.func @transform_5(%arg0: i32) -> (i32, i32) {
    %c0_i32 = arith.constant 0 : i32
    %c0_i32_0 = arith.constant 0 : i32
    %c0_i32_1 = arith.constant 0 : i32
    return %c0_i32, %c0_i32_0 : i32, i32
  }
  func.func @transform_6(%arg0: i32) -> (i32, i32) {
    %c0_i32 = arith.constant 0 : i32
    %c0_i32_0 = arith.constant 0 : i32
    %c0_i32_1 = arith.constant 0 : i32
    return %c0_i32, %c0_i32_0 : i32, i32
  }
  func.func @transform_7(%arg0: i32) -> (i32, i32) {
    %c0_i32 = arith.constant 0 : i32
    %c0_i32_0 = arith.constant 0 : i32
    return %arg0, %c0_i32 : i32, i32
  }
}

</mosaic_0001>

<llo_original>
// kernel: tpu_custom_call.1
$region0: #{tpu_custom_call.1}
  #allocation0 [shape = 'u32[]', space=smem, size = 0x4, offset = 0x4, fixed_abs, tag = 'smem constant byte address 0x4 - core index']
  #allocation1 [shape = 'u32[144,128]{1,0:T(1,128)}', space=vmem, size = 0x12000, scoped, tag = 'internal scratch']
  %s0 = inlined_call_operand.vmem [shape: bf16[64,32], index: 0, kind: input, shape index: {}]
  %s1 = inlined_call_operand.vmem [shape: bf16[32,96], index: 1, kind: input, shape index: {}]
  %s2 = inlined_call_operand.vmem [shape: bf16[32,32], index: 2, kind: input, shape index: {}]
  %s3 = inlined_call_operand.vmem [shape: f32[32,28], index: 3, kind: input, shape index: {}]
  %s4 = inlined_call_operand.vmem [shape: f32[224,28], index: 4, kind: input, shape index: {}]
  %s5 = inlined_call_operand.vmem [shape: f32[28,224], index: 5, kind: input, shape index: {}]
  %s6 = inlined_call_operand.vmem [shape: f32[224,32], index: 6, kind: input, shape index: {}]
  %s7 = inlined_call_operand.vmem [shape: f32[64,32], index: 7, kind: output, shape index: {}]
  %s8 = sld [smem:[#allocation0]]
  $region61: #{tpu_custom_call.1} parent=0
    _
  %s10 = ssub.s32 1, %s8
  %s11 = scalar_select 0, %s10, %s8
  loop: start=0, step=1, limit=4
  $region2: #{tpu_custom_call.1} parent=0 // loop_pre_header
    _
  $region3: #{tpu_custom_call.1} parent=0 // loop_header
    %s13 = sphi 0, %s17
    %p14 = scmp.ge.s32.totalorder %s13, 4
    %s23 = sphi 0, %s25
    %s26 = sphi 0, %s23
    %s27 = sphi 0, %s26
    %s43 = sphi 0, %s27
    %s47 = sphi 0, %s47
    %s49 = sphi 0, %s47
    %s50 = sphi 0, %s49
    %s64 = sphi 0, %s50
    %s68 = sphi 0, %s68
    %s70 = sphi 0, %s68
    %s71 = sphi 0, %s70
    %s85 = sphi 0, %s71
    %s89 = sphi 0, %s89
    %s91 = sphi 0, %s89
    %s92 = sphi 0, %s91
    %s106 = sphi 0, %s92
    %s110 = sphi 0, %s110
    %s112 = sphi 0, %s110
    %s113 = sphi 0, %s112
    %s127 = sphi 0, %s113
    %s131 = sphi 0, %s131
    %s133 = sphi 0, %s131
    %s134 = sphi 0, %s133
    %s148 = sphi 0, %s134
    %s152 = sphi 0, %s152
    %s154 = sphi 0, %s152
    %s155 = sphi 0, %s154
    %s169 = sphi 0, %s155
    %s175 = sphi 0, %s177
    %s178 = sphi 0, %s175
    %s179 = sphi 0, %s178
    %s195 = sphi 0, %s179
  $region4: #{tpu_custom_call.1} parent=0 // loop_header_branch
    %16 = sbr.rel (%p14) target = $region8
  $region5: #{tpu_custom_call.1} parent=0 // loop_body
    %s18 = ssub.s32 %s13, 1
    %s19 = ssub.s32 %s13, 2
    %s20 = sadd.s32 %s13, 1
    %s21 = ssub.s32 %s13, %s20
    %p22 = scmp.eq.s32.totalorder %s21, 0
    %s24 = sadd.s32 %s23, 1
    %s25 = scalar_select %p22, %s23, %s24
    %p28 = pneg %p22
    %p29 = scmp.eq.s32.totalorder %s13, 1
    %p30 = por %p28, %p29
    %p31 = scmp.ne.s32.totalorder %s23, %s26
    %p32 = scmp.eq.s32.totalorder %s13, 0
    %p33 = por %p31, %p32
    %p34 = scmp.ne.s32.totalorder %s23, %s26
    %p35 = scmp.eq.s32.totalorder %s18, 1
    %p36 = por %p34, %p35
    %p37 = scmp.ne.s32.totalorder %s26, %s27
    %p38 = scmp.eq.s32.totalorder %s18, 0
    %p39 = por %p37, %p38
    %p40 = scmp.ne.s32.totalorder %s26, %s27
    %p41 = scmp.eq.s32.totalorder %s19, 1
    %p42 = por %p40, %p41
    %p44 = scmp.ne.s32.totalorder %s27, %s43
    %p45 = scmp.eq.s32.totalorder %s19, 0
    %p46 = por %p44, %p45
    %s48 = sadd.s32 %s47, 1
    %p51 = scmp.eq.s32.totalorder %s13, 1
    %p52 = scmp.ne.s32.totalorder %s47, %s49
    %p53 = scmp.eq.s32.totalorder %s13, 0
    %p54 = por %p52, %p53
    %p55 = scmp.ne.s32.totalorder %s47, %s49
    %p56 = scmp.eq.s32.totalorder %s18, 1
    %p57 = por %p55, %p56
    %p58 = scmp.ne.s32.totalorder %s49, %s50
    %p59 = scmp.eq.s32.totalorder %s18, 0
    %p60 = por %p58, %p59
    %p61 = scmp.ne.s32.totalorder %s49, %s50
    %p62 = scmp.eq.s32.totalorder %s19, 1
    %p63 = por %p61, %p62
    %p65 = scmp.ne.s32.totalorder %s50, %s64
    %p66 = scmp.eq.s32.totalorder %s19, 0
    %p67 = por %p65, %p66
    %s69 = sadd.s32 %s68, 1
    %p72 = scmp.eq.s32.totalorder %s13, 1
    %p73 = scmp.ne.s32.totalorder %s68, %s70
    %p74 = scmp.eq.s32.totalorder %s13, 0
    %p75 = por %p73, %p74
    %p76 = scmp.ne.s32.totalorder %s68, %s70
    %p77 = scmp.eq.s32.totalorder %s18, 1
    %p78 = por %p76, %p77
    %p79 = scmp.ne.s32.totalorder %s70, %s71
    %p80 = scmp.eq.s32.totalorder %s18, 0
    %p81 = por %p79, %p80
    %p82 = scmp.ne.s32.totalorder %s70, %s71
    %p83 = scmp.eq.s32.totalorder %s19, 1
    %p84 = por %p82, %p83
    %p86 = scmp.ne.s32.totalorder %s71, %s85
    %p87 = scmp.eq.s32.totalorder %s19, 0
    %p88 = por %p86, %p87
    %s90 = sadd.s32 %s89, 1
    %p93 = scmp.eq.s32.totalorder %s13, 1
    %p94 = scmp.ne.s32.totalorder %s89, %s91
    %p95 = scmp.eq.s32.totalorder %s13, 0
    %p96 = por %p94, %p95
    %p97 = scmp.ne.s32.totalorder %s89, %s91
    %p98 = scmp.eq.s32.totalorder %s18, 1
    %p99 = por %p97, %p98
    %p100 = scmp.ne.s32.totalorder %s91, %s92
    %p101 = scmp.eq.s32.totalorder %s18, 0
    %p102 = por %p100, %p101
    %p103 = scmp.ne.s32.totalorder %s91, %s92
    %p104 = scmp.eq.s32.totalorder %s19, 1
    %p105 = por %p103, %p104
    %p107 = scmp.ne.s32.totalorder %s92, %s106
    %p108 = scmp.eq.s32.totalorder %s19, 0
    %p109 = por %p107, %p108
    %s111 = sadd.s32 %s110, 1
    %p114 = scmp.eq.s32.totalorder %s13, 1
    %p115 = scmp.ne.s32.totalorder %s110, %s112
    %p116 = scmp.eq.s32.totalorder %s13, 0
    %p117 = por %p115, %p116
    %p118 = scmp.ne.s32.totalorder %s110, %s112
    %p119 = scmp.eq.s32.totalorder %s18, 1
    %p120 = por %p118, %p119
    %p121 = scmp.ne.s32.totalorder %s112, %s113
    %p122 = scmp.eq.s32.totalorder %s18, 0
    %p123 = por %p121, %p122
    %p124 = scmp.ne.s32.totalorder %s112, %s113
    %p125 = scmp.eq.s32.totalorder %s19, 1
    %p126 = por %p124, %p125
    %p128 = scmp.ne.s32.totalorder %s113, %s127
    %p129 = scmp.eq.s32.totalorder %s19, 0
    %p130 = por %p128, %p129
    %s132 = sadd.s32 %s131, 1
    %p135 = scmp.eq.s32.totalorder %s13, 1
    %p136 = scmp.ne.s32.totalorder %s131, %s133
    %p137 = scmp.eq.s32.totalorder %s13, 0
    %p138 = por %p136, %p137
    %p139 = scmp.ne.s32.totalorder %s131, %s133
    %p140 = scmp.eq.s32.totalorder %s18, 1
    %p141 = por %p139, %p140
    %p142 = scmp.ne.s32.totalorder %s133, %s134
    %p143 = scmp.eq.s32.totalorder %s18, 0
    %p144 = por %p142, %p143
    %p145 = scmp.ne.s32.totalorder %s133, %s134
    %p146 = scmp.eq.s32.totalorder %s19, 1
    %p147 = por %p145, %p146
    %p149 = scmp.ne.s32.totalorder %s134, %s148
    %p150 = scmp.eq.s32.totalorder %s19, 0
    %p151 = por %p149, %p150
    %s153 = sadd.s32 %s152, 1
    %p156 = scmp.eq.s32.totalorder %s13, 1
    %p157 = scmp.ne.s32.totalorder %s152, %s154
    %p158 = scmp.eq.s32.totalorder %s13, 0
    %p159 = por %p157, %p158
    %p160 = scmp.ne.s32.totalorder %s152, %s154
    %p161 = scmp.eq.s32.totalorder %s18, 1
    %p162 = por %p160, %p161
    %p163 = scmp.ne.s32.totalorder %s154, %s155
    %p164 = scmp.eq.s32.totalorder %s18, 0
    %p165 = por %p163, %p164
    %p166 = scmp.ne.s32.totalorder %s154, %s155
    %p167 = scmp.eq.s32.totalorder %s19, 1
    %p168 = por %p166, %p167
    %p170 = scmp.ne.s32.totalorder %s155, %s169
    %p171 = scmp.eq.s32.totalorder %s19, 0
    %p172 = por %p170, %p171
    %s173 = ssub.s32 %s13, %s20
    %p174 = scmp.eq.s32.totalorder %s173, 0
    %s176 = sadd.s32 %s175, 1
    %s177 = scalar_select %p174, %s175, %s176
    %p180 = pneg %p174
    %p181 = scmp.eq.s32.totalorder %s13, 1
    %p182 = por %p180, %p181
    %p183 = scmp.ne.s32.totalorder %s175, %s178
    %p184 = scmp.eq.s32.totalorder %s13, 0
    %p185 = por %p183, %p184
    %p186 = scmp.ne.s32.totalorder %s175, %s178
    %p187 = scmp.eq.s32.totalorder %s18, 1
    %p188 = por %p186, %p187
    %p189 = scmp.ne.s32.totalorder %s178, %s179
    %p190 = scmp.eq.s32.totalorder %s18, 0
    %p191 = por %p189, %p190
    %p192 = scmp.ne.s32.totalorder %s178, %s179
    %p193 = scmp.eq.s32.totalorder %s19, 1
    %p194 = por %p192, %p193
    %p196 = scmp.ne.s32.totalorder %s179, %s195
    %p197 = scmp.eq.s32.totalorder %s19, 0
    %p198 = por %p196, %p197
    %p199 = scmp.le.s32.totalorder 1, %s13
    %p200 = scmp.lt.s32.totalorder %s13, 3
    %p201 = pnand %p199, %p200
    %p202 = pneg %p201
    // Predicated region
    $region9: #{tpu_custom_call.1} parent=5 // pred_check
      _
    $region10: #{tpu_custom_call.1} parent=5 // pred_check_branch
      %204 = sbr.rel (%p201) target = $region12
    $region11: #{tpu_custom_call.1} parent=5 // pred_region
      %s205 = ssub.s32 %s13, 1
      // Predicated region
      $region13: #{tpu_custom_call.1} parent=11 // pred_check
        %p206 = pneg %p60
      $region14: #{tpu_custom_call.1} parent=11 // pred_check_branch
        %208 = sbr.rel (%p206) target = $region16
      $region15: #{tpu_custom_call.1} parent=11 // pred_region
        _
      $region16: #{tpu_custom_call.1} parent=11 // pred_fallthru
        _
      // Predicated region
      $region17: #{tpu_custom_call.1} parent=11 // pred_check
        %p209 = pneg %p81
      $region18: #{tpu_custom_call.1} parent=11 // pred_check_branch
        %211 = sbr.rel (%p209) target = $region20
      $region19: #{tpu_custom_call.1} parent=11 // pred_region
        _
      $region20: #{tpu_custom_call.1} parent=11 // pred_fallthru
        _
      // Predicated region
      $region21: #{tpu_custom_call.1} parent=11 // pred_check
        %p212 = pneg %p102
      $region22: #{tpu_custom_call.1} parent=11 // pred_check_branch
        %214 = sbr.rel (%p212) target = $region24
      $region23: #{tpu_custom_call.1} parent=11 // pred_region
        _
      $region24: #{tpu_custom_call.1} parent=11 // pred_fallthru
        _
      // Predicated region
      $region25: #{tpu_custom_call.1} parent=11 // pred_check
        %p215 = pneg %p123
      $region26: #{tpu_custom_call.1} parent=11 // pred_check_branch
        %217 = sbr.rel (%p215) target = $region28
      $region27: #{tpu_custom_call.1} parent=11 // pred_region
        _
      $region28: #{tpu_custom_call.1} parent=11 // pred_fallthru
        _
      // Predicated region
      $region29: #{tpu_custom_call.1} parent=11 // pred_check
        %p218 = pneg %p144
      $region30: #{tpu_custom_call.1} parent=11 // pred_check_branch
        %220 = sbr.rel (%p218) target = $region32
      $region31: #{tpu_custom_call.1} parent=11 // pred_region
        _
      $region32: #{tpu_custom_call.1} parent=11 // pred_fallthru
        _
      // Predicated region
      $region33: #{tpu_custom_call.1} parent=11 // pred_check
        %p221 = pneg %p165
      $region34: #{tpu_custom_call.1} parent=11 // pred_check_branch
        %223 = sbr.rel (%p221) target = $region36
      $region35: #{tpu_custom_call.1} parent=11 // pred_region
        _
      $region36: #{tpu_custom_call.1} parent=11 // pred_fallthru
        _
    $region12: #{tpu_custom_call.1} parent=5 // pred_fallthru
      _
    %p224 = scmp.lt.s32.totalorder %s13, 2
    // Predicated region
    $region37: #{tpu_custom_call.1} parent=5 // pred_check
      %p225 = pneg %p224
    $region38: #{tpu_custom_call.1} parent=5 // pred_check_branch
      %227 = sbr.rel (%p225) target = $region40
    $region39: #{tpu_custom_call.1} parent=5 // pred_region
      // Predicated region
      $region41: #{tpu_custom_call.1} parent=39 // pred_check
        %p228 = pneg %p33
      $region42: #{tpu_custom_call.1} parent=39 // pred_check_branch
        %230 = sbr.rel (%p228) target = $region44
      $region43: #{tpu_custom_call.1} parent=39 // pred_region
        %s231 = smul.u32 4, %s13
        %p232 = scmp.lt.s32.totalorder %s231, 7
        %s233 = scalar_select %p232, %s231, 7
        %s234 = smul.addr %s233, 4
        %s235 = scalar_lea.vmem %s0, %s234
        %s236 = smul.u32 4, %s13
      $region44: #{tpu_custom_call.1} parent=39 // pred_fallthru
        _
    $region40: #{tpu_custom_call.1} parent=5 // pred_fallthru
      _
    %p237 = scmp.le.s32.totalorder 1, %s13
    %p238 = scmp.lt.s32.totalorder %s13, 3
    %p239 = pnand %p237, %p238
    %p240 = pneg %p239
    // Predicated region
    $region45: #{tpu_custom_call.1} parent=5 // pred_check
      _
    $region46: #{tpu_custom_call.1} parent=5 // pred_check_branch
      %242 = sbr.rel (%p239) target = $region48
    $region47: #{tpu_custom_call.1} parent=5 // pred_region
      %s243 = ssub.s32 %s13, 1
      %s244 = smul.u32 4, %s18
      %p245 = scmp.lt.s32.totalorder %s244, 7
      %s246 = scalar_select %p245, %s244, 7
      %s247 = smul.addr %s246, 4
      %s248 = scalar_lea.vmem %s0, %s247
      %p249 = pneg %p39
      %p250 = pneg %p36
      %p251 = pneg %p60
      %p252 = pneg %p57
      %p253 = pneg %p81
      %p254 = pneg %p78
      %p255 = pneg %p102
      %p256 = pneg %p99
      %p257 = pneg %p123
      %p258 = pneg %p120
      %p259 = pneg %p144
      %p260 = pneg %p141
      %p261 = pneg %p165
      %p262 = pneg %p162
      %p263 = pneg %p191
      %p264 = pneg %p188
      %s265 = smul.u32 4, %s18
      %p266 = scmp.lt.s32.totalorder %s265, 7
      %s267 = scalar_select %p266, %s265, 7
      %s268 = smul.addr %s267, 8
      %s269 = scalar_lea.vmem %s7, %s268
      %s270 = smul.u32 4, %s18
      %p271 = scmp.lt.s32.totalorder %s270, 7
      %s272 = scalar_select %p271, %s270, 7
      %s273 = smul.addr %s272, 4
      %s274 = scalar_lea.vmem %s0, %s273
      %s275 = smul.u32 4, %s18
      %s276 = smul.u32 4, %s18
      %p277 = scmp.lt.s32.totalorder %s276, 7
      %s278 = scalar_select %p277, %s276, 7
      %s279 = smul.addr %s278, 8
      %s280 = scalar_lea.vmem %s7, %s279
      %s281 = smul.u32 4, %s18
      %v283 = vld [vmem:[%s274] sm:$0xf]
      %v284 = vld [vmem:[%s274 + $0x4] sm:$0xf]
      %v285 = vld [vmem:[%s274 + $0x8] sm:$0xf]
      %v286 = vld [vmem:[%s274 + $0xc] sm:$0xf]
      %v287 = vld [vmem:[%s1] sm:$0xf]
      %v288 = vld [vmem:[%s1 + $0x4] sm:$0xf]
      %v289 = vld [vmem:[%s1 + $0x8] sm:$0xf]
      %v290 = vld [vmem:[%s1 + $0xc] sm:$0xf]
      %v295 = vunpack.c.l.b16 %v283
      %v296 = vunpack.c.l.b16 %v284
      %v297 = vunpack.c.l.b16 %v285
      %v298 = vunpack.c.l.b16 %v286
      %v299 = vpack.c.b16 %v296, %v295
      %v300 = vpack.c.b16 %v298, %v297
      %v305 = vunpack.c.l.b16 %v287
      %v306 = vunpack.c.l.b16 %v288
      %v307 = vunpack.c.l.b16 %v289
      %v308 = vunpack.c.l.b16 %v290
      %v309 = vpack.c.b16 %v306, %v305
      %v310 = vpack.c.b16 %v308, %v307
      %vm313 = vcmask 261120
      %v315 = vsel %vm313, %v299, 0
      %v318 = vsel %vm313, %v300, 0
      %320 = vmatprep.subr.bf16.mxu0 0
      %321 = vmatpush1.bf16.msra.mxu0 %v309
      %322 = vmatprep.subr.bf16.mxu0 0
      %323 = vmatpush1.bf16.msra.mxu0 %v310
      %324 = vmatprep.subr.bf16.mxu0 0
      %325 = vmatpush1.bf16.msra.mxu0 0
      %326 = vmatprep.subr.bf16.mxu0 0
      %327 = vmatpush1.bf16.msra.mxu0 0
      %328 = vmatprep.subr.bf16.mxu0 0
      %329 = vmatpush1.bf16.msra.mxu0 0
      %330 = vmatprep.subr.bf16.mxu0 0
      %331 = vmatpush1.bf16.msra.mxu0 0
      %332 = vmatprep.subr.bf16.mxu0 0
      %333 = vmatpush1.bf16.msra.mxu0 0
      %334 = vmatprep.subr.bf16.mxu0 0
      %335 = vmatpush1.bf16.msra.mxu0 0
      %336 = vmatprep.subr.bf16.mxu0 0
      %337 = vmatpush1.bf16.msra.mxu0 0
      %338 = vmatprep.subr.bf16.mxu0 0
      %339 = vmatpush1.bf16.msra.mxu0 0
      %340 = vmatprep.subr.bf16.mxu0 0
      %341 = vmatpush1.bf16.msra.mxu0 0
      %342 = vmatprep.subr.bf16.mxu0 0
      %343 = vmatpush1.bf16.msra.mxu0 0
      %344 = vmatprep.subr.bf16.mxu0 0
      %345 = vmatpush1.bf16.msra.mxu0 0
      %346 = vmatprep.subr.bf16.mxu0 0
      %347 = vmatpush1.bf16.msra.mxu0 0
      %348 = vmatprep.subr.bf16.mxu0 0
      %349 = vmatpush1.bf16.msra.mxu0 0
      %350 = vmatprep.subr.bf16.mxu0 0
      %351 = vmatpush1.bf16.msra.mxu0 0
      %352 = vmatprep.mubr.bf16.mxu0 0
      %353 = vmatmul.mubr.bf16.gmra.mrb[0].mxu0 %v315
      %v354 = vpop.f32.mrb[0].mxu0
      %v355 = vadd.f32 0.0, %v354
      %v356 = vpop.f32.mrb[0].mxu0
      %v357 = vpop.f32.mrb[0].mxu0
      %v358 = vadd.f32 0.0, %v357
      %v359 = vpop.f32.mrb[0].mxu0
      %360 = vmatprep.mubr.bf16.mxu0 0
      %361 = vmatmul.mubr.bf16.gmra.mrb[0].mxu0 %v318
      %v362 = vpop.f32.mrb[0].mxu0
      %v363 = vadd.f32 0.0, %v362
      %v364 = vpop.f32.mrb[0].mxu0
      %v365 = vpop.f32.mrb[0].mxu0
      %v366 = vadd.f32 0.0, %v365
      %v367 = vpop.f32.mrb[0].mxu0
      %368 = vdwg.mxu0
      %v369 = vlaneseq
      %v370 = vshrl.u32 %v369, 7
      %v371 = vadd.s32 %v370, 8
      %v372 = vadd.s32 %v370, 16
      %v373 = vadd.s32 %v370, 24
      %vm374 = vcmp.lt.s32.totalorder %v370, 0
      %v375 = vsub.s32 0, %v370
      %v376 = vsel %vm374, %v375, %v370
      %v377 = vshrl.u32 %v376, 3
      %v378 = vand.u32 %v376, 7
      %v379 = vsub.s32 0, %v378
      %v380 = vsel %vm374, %v379, %v378
      %vm381 = vcmp.lt.s32.totalorder %v371, 0
      %v382 = vsub.s32 0, %v371
      %v383 = vsel %vm381, %v382, %v371
      %v384 = vshrl.u32 %v383, 3
      %v385 = vand.u32 %v383, 7
      %v386 = vsub.s32 0, %v385
      %v387 = vsel %vm381, %v386, %v385
      %vm388 = vcmp.lt.s32.totalorder %v372, 0
      %v389 = vsub.s32 0, %v372
      %v390 = vsel %vm388, %v389, %v372
      %v391 = vshrl.u32 %v390, 3
      %v392 = vand.u32 %v390, 7
      %v393 = vsub.s32 0, %v392
      %v394 = vsel %vm388, %v393, %v392
      %vm395 = vcmp.lt.s32.totalorder %v373, 0
      %v396 = vsub.s32 0, %v373
      %v397 = vsel %vm395, %v396, %v373
      %v398 = vshrl.u32 %v397, 3
      %v399 = vand.u32 %v397, 7
      %v400 = vsub.s32 0, %v399
      %v401 = vsel %vm395, %v400, %v399
      %vm402 = vcmp.ne.s32.totalorder %v380, 0
      %vm403 = vcmp.ne.s32.totalorder %v387, 0
      %vm404 = vcmp.ne.s32.totalorder %v394, 0
      %vm405 = vcmp.ne.s32.totalorder %v401, 0
      %vm406 = vcmp.lt.s32.totalorder %v380, 0
      %vm407 = vcmp.lt.s32.totalorder %v387, 0
      %vm408 = vcmp.lt.s32.totalorder %v394, 0
      %vm409 = vcmp.lt.s32.totalorder %v401, 0
      %vm410 = vmand %vm406, %vm402
      %vm411 = vmand %vm407, %vm403
      %vm412 = vmand %vm408, %vm404
      %vm413 = vmand %vm409, %vm405
      %v414 = vadd.s32 %v380, 8
      %v415 = vadd.s32 %v387, 8
      %v416 = vadd.s32 %v394, 8
      %v417 = vadd.s32 %v401, 8
      %v418 = vsel %vm410, %v414, %v380
      %v419 = vsel %vm411, %v415, %v387
      %v420 = vsel %vm412, %v416, %v394
      %v421 = vsel %vm413, %v417, %v401
      %vm426 = vcmask 1042432
      %v427 = vrot.slane %v355, 5
      %v428 = vrot.slane %v358, 5
      %v429 = vsel %vm426, %v427, %v428
      %v430 = vrot.slane %v363, 5
      %v431 = vsel %vm426, %v428, %v430
      %v432 = vrot.slane %v366, 5
      %v433 = vsel %vm426, %v430, %v432
      %434 = vrot.lane.b32.xlu0 %v427, 96
      %v435 = vpop.permute.xlu0 %434
      %436 = vrot.lane.b32.xlu0 %v429, 96
      %v437 = vpop.permute.xlu0 %436
      %438 = vrot.lane.b32.xlu0 %v431, 96
      %v439 = vpop.permute.xlu0 %438
      %440 = vrot.lane.b32.xlu0 %v433, 96
      %v441 = vpop.permute.xlu0 %440
      %v446 = vsel %vm426, 0.0, %v435
      %v447 = vadd.s32 %v418, 4294967293
      %v448 = vadd.s32 %v419, 4294967293
      %v449 = vadd.s32 %v420, 4294967293
      %v450 = vadd.s32 %v421, 4294967293
      %vm451 = vcmp.ge.s32.totalorder %v447, 0
      %vm452 = vcmp.ge.s32.totalorder %v448, 0
      %vm453 = vcmp.ge.s32.totalorder %v449, 0
      %vm454 = vcmp.ge.s32.totalorder %v450, 0
      %vm455 = vcmp.lt.s32.totalorder %v447, 8
      %vm456 = vcmp.lt.s32.totalorder %v448, 8
      %vm457 = vcmp.lt.s32.totalorder %v449, 8
      %vm458 = vcmp.lt.s32.totalorder %v450, 8
      %vm459 = vmand %vm451, %vm455
      %vm460 = vmand %vm452, %vm456
      %vm461 = vmand %vm453, %vm457
      %vm462 = vmand %vm454, %vm458
      %v463 = vsel %vm459, 1, 0
      %v464 = vsel %vm460, 1, 0
      %v465 = vsel %vm461, 1, 0
      %v466 = vsel %vm462, 1, 0
      %v467 = vcvt.s32.f32 %v463
      %v468 = vcvt.s32.f32 %v464
      %v469 = vcvt.s32.f32 %v465
      %v470 = vcvt.s32.f32 %v466
      %v471 = vmul.f32 %v446, %v467
      %v472 = vmul.f32 %v437, %v468
      %v473 = vmul.f32 %v439, %v469
      %v474 = vmul.f32 %v441, %v470
      %vm475 = vcmask 1041408
      %v476 = vrot.slane %v355, 6
      %v477 = vrot.slane %v358, 6
      %v478 = vsel %vm475, %v476, %v477
      %v479 = vrot.slane %v363, 6
      %v480 = vsel %vm475, %v477, %v479
      %v481 = vrot.slane %v366, 6
      %v482 = vsel %vm475, %v479, %v481
      %483 = vrot.lane.b32.xlu0 %v476, 96
      %v484 = vpop.permute.xlu0 %483
      %485 = vrot.lane.b32.xlu0 %v478, 96
      %v486 = vpop.permute.xlu0 %485
      %487 = vrot.lane.b32.xlu0 %v480, 96
      %v488 = vpop.permute.xlu0 %487
      %489 = vrot.lane.b32.xlu0 %v482, 96
      %v490 = vpop.permute.xlu0 %489
      %v495 = vsel %vm475, 0.0, %v484
      %v496 = vadd.s32 %v418, 4294967294
      %v497 = vadd.s32 %v419, 4294967294
      %v498 = vadd.s32 %v420, 4294967294
      %v499 = vadd.s32 %v421, 4294967294
      %vm500 = vcmp.ge.s32.totalorder %v496, 0
      %vm501 = vcmp.ge.s32.totalorder %v497, 0
      %vm502 = vcmp.ge.s32.totalorder %v498, 0
      %vm503 = vcmp.ge.s32.totalorder %v499, 0
      %vm504 = vcmp.lt.s32.totalorder %v496, 8
      %vm505 = vcmp.lt.s32.totalorder %v497, 8
      %vm506 = vcmp.lt.s32.totalorder %v498, 8
      %vm507 = vcmp.lt.s32.totalorder %v499, 8
      %vm508 = vmand %vm500, %vm504
      %vm509 = vmand %vm501, %vm505
      %vm510 = vmand %vm502, %vm506
      %vm511 = vmand %vm503, %vm507
      %v512 = vsel %vm508, 1, 0
      %v513 = vsel %vm509, 1, 0
      %v514 = vsel %vm510, 1, 0
      %v515 = vsel %vm511, 1, 0
      %v516 = vcvt.s32.f32 %v512
      %v517 = vcvt.s32.f32 %v513
      %v518 = vcvt.s32.f32 %v514
      %v519 = vcvt.s32.f32 %v515
      %v520 = vmul.f32 %v495, %v516
      %v521 = vmul.f32 %v486, %v517
      %v522 = vmul.f32 %v488, %v518
      %v523 = vmul.f32 %v490, %v519
      %vm524 = vcmask 1040384
      %v525 = vrot.slane %v355, 7
      %v526 = vrot.slane %v358, 7
      %v527 = vsel %vm524, %v525, %v526
      %v528 = vrot.slane %v363, 7
      %v529 = vsel %vm524, %v526, %v528
      %v530 = vrot.slane %v366, 7
      %v531 = vsel %vm524, %v528, %v530
      %532 = vrot.lane.b32.xlu0 %v525, 96
      %v533 = vpop.permute.xlu0 %532
      %534 = vrot.lane.b32.xlu0 %v527, 96
      %v535 = vpop.permute.xlu0 %534
      %536 = vrot.lane.b32.xlu0 %v529, 96
      %v537 = vpop.permute.xlu0 %536
      %538 = vrot.lane.b32.xlu0 %v531, 96
      %v539 = vpop.permute.xlu0 %538
      %v544 = vsel %vm524, 0.0, %v533
      %v545 = vadd.s32 %v418, 4294967295
      %v546 = vadd.s32 %v419, 4294967295
      %v547 = vadd.s32 %v420, 4294967295
      %v548 = vadd.s32 %v421, 4294967295
      %vm549 = vcmp.ge.s32.totalorder %v545, 0
      %vm550 = vcmp.ge.s32.totalorder %v546, 0
      %vm551 = vcmp.ge.s32.totalorder %v547, 0
      %vm552 = vcmp.ge.s32.totalorder %v548, 0
      %vm553 = vcmp.lt.s32.totalorder %v545, 8
      %vm554 = vcmp.lt.s32.totalorder %v546, 8
      %vm555 = vcmp.lt.s32.totalorder %v547, 8
      %vm556 = vcmp.lt.s32.totalorder %v548, 8
      %vm557 = vmand %vm549, %vm553
      %vm558 = vmand %vm550, %vm554
      %vm559 = vmand %vm551, %vm555
      %vm560 = vmand %vm552, %vm556
      %v561 = vsel %vm557, 1, 0
      %v562 = vsel %vm558, 1, 0
      %v563 = vsel %vm559, 1, 0
      %v564 = vsel %vm560, 1, 0
      %v565 = vcvt.s32.f32 %v561
      %v566 = vcvt.s32.f32 %v562
      %v567 = vcvt.s32.f32 %v563
      %v568 = vcvt.s32.f32 %v564
      %v569 = vmul.f32 %v544, %v565
      %v570 = vmul.f32 %v535, %v566
      %v571 = vmul.f32 %v537, %v567
      %v572 = vmul.f32 %v539, %v568
      %vm573 = vcmask 1046528
      %v574 = vrot.slane %v355, 1
      %v575 = vrot.slane %v358, 1
      %v576 = vsel %vm573, %v574, %v575
      %v577 = vrot.slane %v363, 1
      %v578 = vsel %vm573, %v575, %v577
      %v579 = vrot.slane %v366, 1
      %v580 = vsel %vm573, %v577, %v579
      %v585 = vsel %vm573, %v579, 0.0
      %v586 = vadd.s32 %v418, 1
      %v587 = vadd.s32 %v419, 1
      %v588 = vadd.s32 %v420, 1
      %v589 = vadd.s32 %v421, 1
      %vm590 = vcmp.ge.s32.totalorder %v586, 0
      %vm591 = vcmp.ge.s32.totalorder %v587, 0
      %vm592 = vcmp.ge.s32.totalorder %v588, 0
      %vm593 = vcmp.ge.s32.totalorder %v589, 0
      %vm594 = vcmp.lt.s32.totalorder %v586, 8
      %vm595 = vcmp.lt.s32.totalorder %v587, 8
      %vm596 = vcmp.lt.s32.totalorder %v588, 8
      %vm597 = vcmp.lt.s32.totalorder %v589, 8
      %vm598 = vmand %vm590, %vm594
      %vm599 = vmand %vm591, %vm595
      %vm600 = vmand %vm592, %vm596
      %vm601 = vmand %vm593, %vm597
      %v602 = vsel %vm598, 1, 0
      %v603 = vsel %vm599, 1, 0
      %v604 = vsel %vm600, 1, 0
      %v605 = vsel %vm601, 1, 0
      %v606 = vcvt.s32.f32 %v602
      %v607 = vcvt.s32.f32 %v603
      %v608 = vcvt.s32.f32 %v604
      %v609 = vcvt.s32.f32 %v605
      %v610 = vmul.f32 %v576, %v606
      %v611 = vmul.f32 %v578, %v607
      %v612 = vmul.f32 %v580, %v608
      %v613 = vmul.f32 %v585, %v609
      %vm614 = vcmask 1045504
      %v615 = vrot.slane %v355, 2
      %v616 = vrot.slane %v358, 2
      %v617 = vsel %vm614, %v615, %v616
      %v618 = vrot.slane %v363, 2
      %v619 = vsel %vm614, %v616, %v618
      %v620 = vrot.slane %v366, 2
      %v621 = vsel %vm614, %v618, %v620
      %v626 = vsel %vm614, %v620, 0.0
      %v627 = vadd.s32 %v418, 2
      %v628 = vadd.s32 %v419, 2
      %v629 = vadd.s32 %v420, 2
      %v630 = vadd.s32 %v421, 2
      %vm631 = vcmp.ge.s32.totalorder %v627, 0
      %vm632 = vcmp.ge.s32.totalorder %v628, 0
      %vm633 = vcmp.ge.s32.totalorder %v629, 0
      %vm634 = vcmp.ge.s32.totalorder %v630, 0
      %vm635 = vcmp.lt.s32.totalorder %v627, 8
      %vm636 = vcmp.lt.s32.totalorder %v628, 8
      %vm637 = vcmp.lt.s32.totalorder %v629, 8
      %vm638 = vcmp.lt.s32.totalorder %v630, 8
      %vm639 = vmand %vm631, %vm635
      %vm640 = vmand %vm632, %vm636
      %vm641 = vmand %vm633, %vm637
      %vm642 = vmand %vm634, %vm638
      %v643 = vsel %vm639, 1, 0
      %v644 = vsel %vm640, 1, 0
      %v645 = vsel %vm641, 1, 0
      %v646 = vsel %vm642, 1, 0
      %v647 = vcvt.s32.f32 %v643
      %v648 = vcvt.s32.f32 %v644
      %v649 = vcvt.s32.f32 %v645
      %v650 = vcvt.s32.f32 %v646
      %v651 = vmul.f32 %v617, %v647
      %v652 = vmul.f32 %v619, %v648
      %v653 = vmul.f32 %v621, %v649
      %v654 = vmul.f32 %v626, %v650
      %vm655 = vcmask 1044480
      %v656 = vrot.slane %v355, 3
      %v657 = vrot.slane %v358, 3
      %v658 = vsel %vm655, %v656, %v657
      %v659 = vrot.slane %v363, 3
      %v660 = vsel %vm655, %v657, %v659
      %v661 = vrot.slane %v366, 3
      %v662 = vsel %vm655, %v659, %v661
      %v667 = vsel %vm655, %v661, 0.0
      %v668 = vadd.s32 %v418, 3
      %v669 = vadd.s32 %v419, 3
      %v670 = vadd.s32 %v420, 3
      %v671 = vadd.s32 %v421, 3
      %vm672 = vcmp.ge.s32.totalorder %v668, 0
      %vm673 = vcmp.ge.s32.totalorder %v669, 0
      %vm674 = vcmp.ge.s32.totalorder %v670, 0
      %vm675 = vcmp.ge.s32.totalorder %v671, 0
      %vm676 = vcmp.lt.s32.totalorder %v668, 8
      %vm677 = vcmp.lt.s32.totalorder %v669, 8
      %vm678 = vcmp.lt.s32.totalorder %v670, 8
      %vm679 = vcmp.lt.s32.totalorder %v671, 8
      %vm680 = vmand %vm672, %vm676
      %vm681 = vmand %vm673, %vm677
      %vm682 = vmand %vm674, %vm678
      %vm683 = vmand %vm675, %vm679
      %v684 = vsel %vm680, 1, 0
      %v685 = vsel %vm681, 1, 0
      %v686 = vsel %vm682, 1, 0
      %v687 = vsel %vm683, 1, 0
      %v688 = vcvt.s32.f32 %v684
      %v689 = vcvt.s32.f32 %v685
      %v690 = vcvt.s32.f32 %v686
      %v691 = vcvt.s32.f32 %v687
      %v692 = vmul.f32 %v658, %v688
      %v693 = vmul.f32 %v660, %v689
      %v694 = vmul.f32 %v662, %v690
      %v695 = vmul.f32 %v667, %v691
      %700 = vrot.lane.b32.xlu0 %v520, 32
      %v701 = vpop.permute.xlu0 %700
      %702 = vrot.lane.b32.xlu0 %v521, 32
      %v703 = vpop.permute.xlu0 %702
      %704 = vrot.lane.b32.xlu0 %v522, 32
      %v705 = vpop.permute.xlu0 %704
      %706 = vrot.lane.b32.xlu0 %v523, 32
      %v707 = vpop.permute.xlu0 %706
      %716 = vrot.lane.b32.xlu0 %v569, 64
      %v717 = vpop.permute.xlu0 %716
      %718 = vrot.lane.b32.xlu0 %v570, 64
      %v719 = vpop.permute.xlu0 %718
      %720 = vrot.lane.b32.xlu0 %v571, 64
      %v721 = vpop.permute.xlu0 %720
      %722 = vrot.lane.b32.xlu0 %v572, 64
      %v723 = vpop.permute.xlu0 %722
      %728 = vrot.lane.b32.xlu0 %v355, 64
      %v729 = vpop.permute.xlu0 %728
      %730 = vrot.lane.b32.xlu0 %v358, 64
      %v731 = vpop.permute.xlu0 %730
      %732 = vrot.lane.b32.xlu0 %v363, 64
      %v733 = vpop.permute.xlu0 %732
      %734 = vrot.lane.b32.xlu0 %v366, 64
      %v735 = vpop.permute.xlu0 %734
      %744 = vrot.lane.b32.xlu0 %v610, 96
      %v745 = vpop.permute.xlu0 %744
      %746 = vrot.lane.b32.xlu0 %v611, 96
      %v747 = vpop.permute.xlu0 %746
      %748 = vrot.lane.b32.xlu0 %v612, 96
      %v749 = vpop.permute.xlu0 %748
      %750 = vrot.lane.b32.xlu0 %v613, 96
      %v751 = vpop.permute.xlu0 %750
      %760 = vrot.lane.b32.xlu0 %v692, 32
      %v761 = vpop.permute.xlu0 %760
      %762 = vrot.lane.b32.xlu0 %v693, 32
      %v763 = vpop.permute.xlu0 %762
      %764 = vrot.lane.b32.xlu0 %v694, 32
      %v765 = vpop.permute.xlu0 %764
      %766 = vrot.lane.b32.xlu0 %v695, 32
      %v767 = vpop.permute.xlu0 %766
      %v772 = vsel %vm313, %v471, %v701
      %v773 = vsel %vm313, %v472, %v703
      %v774 = vsel %vm313, %v473, %v705
      %v775 = vsel %vm313, %v474, %v707
      %vm776 = vcmask 523264
      %v777 = vsel %vm776, %v772, %v717
      %v778 = vsel %vm776, %v773, %v719
      %v779 = vsel %vm776, %v774, %v721
      %v780 = vsel %vm776, %v775, %v723
      %vm781 = vcmask 785408
      %v782 = vsel %vm781, %v777, %v729
      %v783 = vsel %vm781, %v778, %v731
      %v784 = vsel %vm781, %v779, %v733
      %v785 = vsel %vm781, %v780, %v735
      %v786 = vsel %vm313, %v745, %v651
      %v787 = vsel %vm313, %v747, %v652
      %v788 = vsel %vm313, %v749, %v653
      %v789 = vsel %vm313, %v751, %v654
      %v790 = vsel %vm776, %v786, %v761
      %v791 = vsel %vm776, %v787, %v763
      %v792 = vsel %vm776, %v788, %v765
      %v793 = vsel %vm776, %v789, %v767
      %798 = vrot.lane.b32.xlu0 %v471, 96
      %v799 = vpop.permute.xlu0 %798
      %800 = vrot.lane.b32.xlu0 %v472, 96
      %v801 = vpop.permute.xlu0 %800
      %802 = vrot.lane.b32.xlu0 %v473, 96
      %v803 = vpop.permute.xlu0 %802
      %804 = vrot.lane.b32.xlu0 %v474, 96
      %v805 = vpop.permute.xlu0 %804
      %810 = vrot.lane.b32.xlu0 %v569, 32
      %v811 = vpop.permute.xlu0 %810
      %812 = vrot.lane.b32.xlu0 %v570, 32
      %v813 = vpop.permute.xlu0 %812
      %814 = vrot.lane.b32.xlu0 %v571, 32
      %v815 = vpop.permute.xlu0 %814
      %816 = vrot.lane.b32.xlu0 %v572, 32
      %v817 = vpop.permute.xlu0 %816
      %822 = vrot.lane.b32.xlu0 %v355, 32
      %v823 = vpop.permute.xlu0 %822
      %824 = vrot.lane.b32.xlu0 %v358, 32
      %v825 = vpop.permute.xlu0 %824
      %826 = vrot.lane.b32.xlu0 %v363, 32
      %v827 = vpop.permute.xlu0 %826
      %828 = vrot.lane.b32.xlu0 %v366, 32
      %v829 = vpop.permute.xlu0 %828
      %834 = vrot.lane.b32.xlu0 %v610, 64
      %v835 = vpop.permute.xlu0 %834
      %836 = vrot.lane.b32.xlu0 %v611, 64
      %v837 = vpop.permute.xlu0 %836
      %838 = vrot.lane.b32.xlu0 %v612, 64
      %v839 = vpop.permute.xlu0 %838
      %840 = vrot.lane.b32.xlu0 %v613, 64
      %v841 = vpop.permute.xlu0 %840
      %850 = vrot.lane.b32.xlu0 %v651, 96
      %v851 = vpop.permute.xlu0 %850
      %852 = vrot.lane.b32.xlu0 %v652, 96
      %v853 = vpop.permute.xlu0 %852
      %854 = vrot.lane.b32.xlu0 %v653, 96
      %v855 = vpop.permute.xlu0 %854
      %856 = vrot.lane.b32.xlu0 %v654, 96
      %v857 = vpop.permute.xlu0 %856
      %v862 = vsel %vm313, %v799, %v520
      %v863 = vsel %vm313, %v801, %v521
      %v864 = vsel %vm313, %v803, %v522
      %v865 = vsel %vm313, %v805, %v523
      %v866 = vsel %vm776, %v862, %v811
      %v867 = vsel %vm776, %v863, %v813
      %v868 = vsel %vm776, %v864, %v815
      %v869 = vsel %vm776, %v865, %v817
      %v870 = vsel %vm781, %v866, %v823
      %v871 = vsel %vm781, %v867, %v825
      %v872 = vsel %vm781, %v868, %v827
      %v873 = vsel %vm781, %v869, %v829
      %v874 = vsel %vm313, %v835, %v851
      %v875 = vsel %vm313, %v837, %v853
      %v876 = vsel %vm313, %v839, %v855
      %v877 = vsel %vm313, %v841, %v857
      %v878 = vsel %vm776, %v874, %v692
      %v879 = vsel %vm776, %v875, %v693
      %v880 = vsel %vm776, %v876, %v694
      %v881 = vsel %vm776, %v877, %v695
      %882 = vrot.lane.b32.xlu0 %v355, 96
      %v883 = vpop.permute.xlu0 %882
      %884 = vrot.lane.b32.xlu0 %v358, 96
      %v885 = vpop.permute.xlu0 %884
      %886 = vrot.lane.b32.xlu0 %v363, 96
      %v887 = vpop.permute.xlu0 %886
      %888 = vrot.lane.b32.xlu0 %v366, 96
      %v889 = vpop.permute.xlu0 %888
      %v894 = vsel %vm313, %v355, %v823
      %v895 = vsel %vm313, %v358, %v825
      %v896 = vsel %vm313, %v363, %v827
      %v897 = vsel %vm313, %v366, %v829
      %v898 = vsel %vm776, %v894, %v729
      %v899 = vsel %vm776, %v895, %v731
      %v900 = vsel %vm776, %v896, %v733
      %v901 = vsel %vm776, %v897, %v735
      %v902 = vsel %vm781, %v898, %v883
      %v903 = vsel %vm781, %v899, %v885
      %v904 = vsel %vm781, %v900, %v887
      %v905 = vsel %vm781, %v901, %v889
      %v906 = vmul.f32 %v902, %v782
      %v907 = vmul.f32 %v898, %v790
      %v908 = vmul.f32 %v903, %v783
      %v909 = vmul.f32 %v899, %v791
      %v910 = vmul.f32 %v904, %v784
      %v911 = vmul.f32 %v900, %v792
      %v912 = vmul.f32 %v905, %v785
      %v913 = vmul.f32 %v901, %v793
      %v914 = vld [vmem:[%s4] sm:$0xff]
      %v915 = vld [vmem:[%s4 + $0x8] sm:$0xff]
      %v916 = vld [vmem:[%s4 + $0x10] sm:$0xff]
      %v917 = vld [vmem:[%s4 + $0x18] sm:$0xff]
      %v918 = vld [vmem:[%s4 + $0x20] sm:$0xff]
      %v919 = vld [vmem:[%s4 + $0x28] sm:$0xff]
      %v920 = vld [vmem:[%s4 + $0x30] sm:$0xff]
      %v921 = vld [vmem:[%s4 + $0x38] sm:$0xff]
      %v922 = vld [vmem:[%s4 + $0x40] sm:$0xff]
      %v923 = vld [vmem:[%s4 + $0x48] sm:$0xff]
      %v924 = vld [vmem:[%s4 + $0x50] sm:$0xff]
      %v925 = vld [vmem:[%s4 + $0x58] sm:$0xff]
      %v926 = vld [vmem:[%s4 + $0x60] sm:$0xff]
      %v927 = vld [vmem:[%s4 + $0x68] sm:$0xff]
      %v928 = vld [vmem:[%s4 + $0x70] sm:$0xff]
      %v929 = vld [vmem:[%s4 + $0x78] sm:$0xff]
      %v930 = vld [vmem:[%s4 + $0x80] sm:$0xff]
      %v931 = vld [vmem:[%s4 + $0x88] sm:$0xff]
      %v932 = vld [vmem:[%s4 + $0x90] sm:$0xff]
      %v933 = vld [vmem:[%s4 + $0x98] sm:$0xff]
      %v934 = vld [vmem:[%s4 + $0xa0] sm:$0xff]
      %v935 = vld [vmem:[%s4 + $0xa8] sm:$0xff]
      %v936 = vld [vmem:[%s4 + $0xb0] sm:$0xff]
      %v937 = vld [vmem:[%s4 + $0xb8] sm:$0xff]
      %v938 = vld [vmem:[%s4 + $0xc0] sm:$0xff]
      %v939 = vld [vmem:[%s4 + $0xc8] sm:$0xff]
      %v940 = vld [vmem:[%s4 + $0xd0] sm:$0xff]
      %v941 = vld [vmem:[%s4 + $0xd8] sm:$0xff]
      %v942 = vld [vmem:[%s3] sm:$0xff]
      %v943 = vld [vmem:[%s3 + $0x8] sm:$0xff]
      %v944 = vld [vmem:[%s3 + $0x10] sm:$0xff]
      %v945 = vld [vmem:[%s3 + $0x18] sm:$0xff]
      %v947 = vsel %vm781, %v907, 0
      %v950 = vsel %vm781, %v909, 0
      %v953 = vsel %vm781, %v911, 0
      %v956 = vsel %vm781, %v913, 0
      %958 = vmatprep.subr.mxu0 0.0
      %959 = vmatpush1.msra.mxu0 %v914
      %960 = vmatprep.subr.mxu0 0.0
      %961 = vmatpush1.msra.mxu0 %v915
      %962 = vmatprep.subr.mxu0 0.0
      %963 = vmatpush1.msra.mxu0 %v916
      %964 = vmatprep.subr.mxu0 0.0
      %965 = vmatpush1.msra.mxu0 %v917
      %966 = vmatprep.subr.mxu0 0.0
      %967 = vmatpush1.msra.mxu0 %v918
      %968 = vmatprep.subr.mxu0 0.0
      %969 = vmatpush1.msra.mxu0 %v919
      %970 = vmatprep.subr.mxu0 0.0
      %971 = vmatpush1.msra.mxu0 %v920
      %972 = vmatprep.subr.mxu0 0.0
      %973 = vmatpush1.msra.mxu0 %v921
      %974 = vmatprep.subr.mxu0 0.0
      %975 = vmatpush1.msra.mxu0 %v922
      %976 = vmatprep.subr.mxu0 0.0
      %977 = vmatpush1.msra.mxu0 %v923
      %978 = vmatprep.subr.mxu0 0.0
      %979 = vmatpush1.msra.mxu0 %v924
      %980 = vmatprep.subr.mxu0 0.0
      %981 = vmatpush1.msra.mxu0 %v925
      %982 = vmatprep.subr.mxu0 0.0
      %983 = vmatpush1.msra.mxu0 %v926
      %984 = vmatprep.subr.mxu0 0.0
      %985 = vmatpush1.msra.mxu0 %v927
      %986 = vmatprep.subr.mxu0 0.0
      %987 = vmatpush1.msra.mxu0 %v928
      %988 = vmatprep.subr.mxu0 0.0
      %989 = vmatpush1.msra.mxu0 %v929
      %990 = vmatprep.subr.mxu0 0.0
      %991 = vmatpush1.msra.mxu0 %v930
      %992 = vmatprep.subr.mxu0 0.0
      %993 = vmatpush1.msra.mxu0 %v931
      %994 = vmatprep.subr.mxu0 0.0
      %995 = vmatpush1.msra.mxu0 %v932
      %996 = vmatprep.subr.mxu0 0.0
      %997 = vmatpush1.msra.mxu0 %v933
      %998 = vmatprep.subr.mxu0 0.0
      %999 = vmatpush1.msra.mxu0 %v934
      %1000 = vmatprep.subr.mxu0 0.0
      %1001 = vmatpush1.msra.mxu0 %v935
      %1002 = vmatprep.subr.mxu0 0.0
      %1003 = vmatpush1.msra.mxu0 %v936
      %1004 = vmatprep.subr.mxu0 0.0
      %1005 = vmatpush1.msra.mxu0 %v937
      %1006 = vmatprep.subr.mxu0 0.0
      %1007 = vmatpush1.msra.mxu0 %v938
      %1008 = vmatprep.subr.mxu0 0.0
      %1009 = vmatpush1.msra.mxu0 %v939
      %1010 = vmatprep.subr.mxu0 0.0
      %1011 = vmatpush1.msra.mxu0 %v940
      %1012 = vmatprep.subr.mxu0 0.0
      %1013 = vmatpush1.msra.mxu0 %v941
      %1014 = vmatprep.subr.mxu0 0.0
      %1015 = vmatpush1.msra.mxu0 0.0
      %1016 = vmatprep.subr.mxu0 0.0
      %1017 = vmatpush1.msra.mxu0 0.0
      %1018 = vmatprep.subr.mxu0 0.0
      %1019 = vmatpush1.msra.mxu0 0.0
      %1020 = vmatprep.subr.mxu0 0.0
      %1021 = vmatpush1.msra.mxu0 0.0
      %1022 = vmatprep.mubr.f32.mxu0 %v947
      %1023 = vmatmul.mubr.f32.gmra.mrb[0].mxu0 %v906
      %v1024 = vpop.f32.mrb[0].mxu0
      %v1025 = vadd.f32 %v942, %v1024
      %v1026 = vpop.f32.mrb[0].mxu0
      %1027 = vmatprep.mubr.f32.mxu0 %v950
      %1028 = vmatmul.mubr.f32.gmra.mrb[0].mxu0 %v908
      %v1029 = vpop.f32.mrb[0].mxu0
      %v1030 = vadd.f32 %v943, %v1029
      %v1031 = vpop.f32.mrb[0].mxu0
      %1032 = vmatprep.mubr.f32.mxu0 %v953
      %1033 = vmatmul.mubr.f32.gmra.mrb[0].mxu0 %v910
      %v1034 = vpop.f32.mrb[0].mxu0
      %v1035 = vadd.f32 %v944, %v1034
      %v1036 = vpop.f32.mrb[0].mxu0
      %1037 = vmatprep.mubr.f32.mxu0 %v956
      %1038 = vmatmul.mubr.f32.gmra.mrb[0].mxu0 %v912
      %v1039 = vpop.f32.mrb[0].mxu0
      %v1040 = vadd.f32 %v945, %v1039
      %v1041 = vpop.f32.mrb[0].mxu0
      %1042 = vdwg.mxu0
      %vm1043 = vcmask 228352
      %v1044 = vsel %vm1043, %v1025, -inf
      %1045 = vmax.xlane.f32.xlu0 %v1044
      %v1046 = vpop.xlane.xlu0 %1045
      %v1047 = vsel %vm1043, %v1030, -inf
      %1048 = vmax.xlane.f32.xlu0 %v1047
      %v1049 = vpop.xlane.xlu0 %1048
      %v1050 = vsel %vm1043, %v1035, -inf
      %1051 = vmax.xlane.f32.xlu0 %v1050
      %v1052 = vpop.xlane.xlu0 %1051
      %v1053 = vsel %vm1043, %v1040, -inf
      %1054 = vmax.xlane.f32.xlu0 %v1053
      %v1055 = vpop.xlane.xlu0 %1054
      %v1056 = vsub.f32 %v1025, %v1046
      %v1057 = vsub.f32 %v1030, %v1049
      %v1058 = vsub.f32 %v1035, %v1052
      %v1059 = vsub.f32 %v1040, %v1055
      %v1060 = vmul.f32 %v1056, 1.442695
      %v1061 = vpow.pop %v1060
      %v1062 = vmul.f32 %v1057, 1.442695
      %v1063 = vpow.pop %v1062
      %v1064 = vmul.f32 %v1058, 1.442695
      %v1065 = vpow.pop %v1064
      %v1066 = vmul.f32 %v1059, 1.442695
      %v1067 = vpow.pop %v1066
      %v1068 = vld [vmem:[%s5] sm:$0xff]
      %v1069 = vld [vmem:[%s5 + $0x8] sm:$0xff]
      %v1070 = vld [vmem:[%s5 + $0x10] sm:$0xff]
      %v1071 = vld [vmem:[%s5 + $0x18] sm:$0xff]
      %v1072 = vld [vmem:[%s5 + $0x20] sm:$0xff]
      %v1073 = vld [vmem:[%s5 + $0x28] sm:$0xff]
      %v1074 = vld [vmem:[%s5 + $0x30] sm:$0xf]
      %v1075 = vld [vmem:[%s5 + $0x38] sm:$0xf]
      %v1077 = vsel %vm1043, %v1061, 0
      %v1080 = vsel %vm1043, %v1063, 0
      %v1083 = vsel %vm1043, %v1065, 0
      %v1086 = vsel %vm1043, %v1067, 0
      %vm1088 = vcmask 1043456
      %v1090 = vsel %vm1088, %v1074, 0
      %v1093 = vsel %vm1088, %v1075, 0
      %1095 = vmatprep.subr.mxu0 %v1069
      %1096 = vmatpush1.msra.mxu0 %v1068
      %1097 = vmatprep.subr.mxu0 %v1071
      %1098 = vmatpush1.msra.mxu0 %v1070
      %1099 = vmatprep.subr.mxu0 %v1073
      %1100 = vmatpush1.msra.mxu0 %v1072
      %1101 = vmatprep.subr.mxu0 %v1093
      %1102 = vmatpush1.msra.mxu0 %v1090
      %1103 = vmatprep.subr.mxu0 0.0
      %1104 = vmatpush1.msra.mxu0 0.0
      %1105 = vmatprep.subr.mxu0 0.0
      %1106 = vmatpush1.msra.mxu0 0.0
      %1107 = vmatprep.subr.mxu0 0.0
      %1108 = vmatpush1.msra.mxu0 0.0
      %1109 = vmatprep.subr.mxu0 0.0
      %1110 = vmatpush1.msra.mxu0 0.0
      %1111 = vmatprep.subr.mxu0 0.0
      %1112 = vmatpush1.msra.mxu0 0.0
      %1113 = vmatprep.subr.mxu0 0.0
      %1114 = vmatpush1.msra.mxu0 0.0
      %1115 = vmatprep.subr.mxu0 0.0
      %1116 = vmatpush1.msra.mxu0 0.0
      %1117 = vmatprep.subr.mxu0 0.0
      %1118 = vmatpush1.msra.mxu0 0.0
      %1119 = vmatprep.subr.mxu0 0.0
      %1120 = vmatpush1.msra.mxu0 0.0
      %1121 = vmatprep.subr.mxu0 0.0
      %1122 = vmatpush1.msra.mxu0 0.0
      %1123 = vmatprep.subr.mxu0 0.0
      %1124 = vmatpush1.msra.mxu0 0.0
      %1125 = vmatprep.subr.mxu0 0.0
      %1126 = vmatpush1.msra.mxu0 0.0
      %1127 = vmatprep.subr.mxu0 0.0
      %1128 = vmatpush1.msra.mxu0 0.0
      %1129 = vmatprep.subr.mxu0 0.0
      %1130 = vmatpush1.msra.mxu0 0.0
      %1131 = vmatprep.subr.mxu0 0.0
      %1132 = vmatpush1.msra.mxu0 0.0
      %1133 = vmatprep.subr.mxu0 0.0
      %1134 = vmatpush1.msra.mxu0 0.0
      %1135 = vmatprep.subr.mxu0 0.0
      %1136 = vmatpush1.msra.mxu0 0.0
      %1137 = vmatprep.subr.mxu0 0.0
      %1138 = vmatpush1.msra.mxu0 0.0
      %1139 = vmatprep.subr.mxu0 0.0
      %1140 = vmatpush1.msra.mxu0 0.0
      %1141 = vmatprep.subr.mxu0 0.0
      %1142 = vmatpush1.msra.mxu0 0.0
      %1143 = vmatprep.subr.mxu0 0.0
      %1144 = vmatpush1.msra.mxu0 0.0
      %1145 = vmatprep.subr.mxu0 0.0
      %1146 = vmatpush1.msra.mxu0 0.0
      %1147 = vmatprep.subr.mxu0 0.0
      %1148 = vmatpush1.msra.mxu0 0.0
      %1149 = vmatprep.subr.mxu0 0.0
      %1150 = vmatpush1.msra.mxu0 0.0
      %1151 = vmatprep.subr.mxu0 0.0
      %1152 = vmatpush1.msra.mxu0 0.0
      %1153 = vmatprep.subr.mxu0 0.0
      %1154 = vmatpush1.msra.mxu0 0.0
      %1155 = vmatprep.subr.mxu0 0.0
      %1156 = vmatpush1.msra.mxu0 0.0
      %1157 = vmatprep.subr.mxu0 0.0
      %1158 = vmatpush1.msra.mxu0 0.0
      %1159 = vmatprep.mubr.f32.mxu0 0.0
      %1160 = vmatmul.mubr.f32.gmra.mrb[0].mxu0 %v1077
      %v1161 = vpop.f32.mrb[0].mxu0
      %v1162 = vadd.f32 0.0, %v1161
      %v1163 = vpop.f32.mrb[0].mxu0
      %v1164 = vadd.f32 0.0, %v1163
      %1165 = vmatprep.mubr.f32.mxu0 0.0
      %1166 = vmatmul.mubr.f32.gmra.mrb[0].mxu0 %v1080
      %v1167 = vpop.f32.mrb[0].mxu0
      %v1168 = vadd.f32 0.0, %v1167
      %v1169 = vpop.f32.mrb[0].mxu0
      %v1170 = vadd.f32 0.0, %v1169
      %1171 = vmatprep.mubr.f32.mxu0 0.0
      %1172 = vmatmul.mubr.f32.gmra.mrb[0].mxu0 %v1083
      %v1173 = vpop.f32.mrb[0].mxu0
      %v1174 = vadd.f32 0.0, %v1173
      %v1175 = vpop.f32.mrb[0].mxu0
      %v1176 = vadd.f32 0.0, %v1175
      %1177 = vmatprep.mubr.f32.mxu0 0.0
      %1178 = vmatmul.mubr.f32.gmra.mrb[0].mxu0 %v1086
      %v1179 = vpop.f32.mrb[0].mxu0
      %v1180 = vadd.f32 0.0, %v1179
      %v1181 = vpop.f32.mrb[0].mxu0
      %v1182 = vadd.f32 0.0, %v1181
      %1183 = vdwg.mxu0
      %v1184 = vmul.f32 %v1162, %v870
      %v1185 = vmul.f32 %v1164, %v878
      %v1186 = vmul.f32 %v1168, %v871
      %v1187 = vmul.f32 %v1170, %v879
      %v1188 = vmul.f32 %v1174, %v872
      %v1189 = vmul.f32 %v1176, %v880
      %v1190 = vmul.f32 %v1180, %v873
      %v1191 = vmul.f32 %v1182, %v881
      %v1192 = vld [vmem:[%s6] sm:$0xff]
      %v1193 = vld [vmem:[%s6 + $0x8] sm:$0xff]
      %v1194 = vld [vmem:[%s6 + $0x10] sm:$0xff]
      %v1195 = vld [vmem:[%s6 + $0x18] sm:$0xff]
      %v1196 = vld [vmem:[%s6 + $0x20] sm:$0xff]
      %v1197 = vld [vmem:[%s6 + $0x28] sm:$0xff]
      %v1198 = vld [vmem:[%s6 + $0x30] sm:$0xff]
      %v1199 = vld [vmem:[%s6 + $0x38] sm:$0xff]
      %v1200 = vld [vmem:[%s6 + $0x40] sm:$0xff]
      %v1201 = vld [vmem:[%s6 + $0x48] sm:$0xff]
      %v1202 = vld [vmem:[%s6 + $0x50] sm:$0xff]
      %v1203 = vld [vmem:[%s6 + $0x58] sm:$0xff]
      %v1204 = vld [vmem:[%s6 + $0x60] sm:$0xff]
      %v1205 = vld [vmem:[%s6 + $0x68] sm:$0xff]
      %v1206 = vld [vmem:[%s6 + $0x70] sm:$0xff]
      %v1207 = vld [vmem:[%s6 + $0x78] sm:$0xff]
      %v1208 = vld [vmem:[%s6 + $0x80] sm:$0xff]
      %v1209 = vld [vmem:[%s6 + $0x88] sm:$0xff]
      %v1210 = vld [vmem:[%s6 + $0x90] sm:$0xff]
      %v1211 = vld [vmem:[%s6 + $0x98] sm:$0xff]
      %v1212 = vld [vmem:[%s6 + $0xa0] sm:$0xff]
      %v1213 = vld [vmem:[%s6 + $0xa8] sm:$0xff]
      %v1214 = vld [vmem:[%s6 + $0xb0] sm:$0xff]
      %v1215 = vld [vmem:[%s6 + $0xb8] sm:$0xff]
      %v1216 = vld [vmem:[%s6 + $0xc0] sm:$0xff]
      %v1217 = vld [vmem:[%s6 + $0xc8] sm:$0xff]
      %v1218 = vld [vmem:[%s6 + $0xd0] sm:$0xff]
      %v1219 = vld [vmem:[%s6 + $0xd8] sm:$0xff]
      %v1221 = vsel %vm781, %v1185, 0
      %v1224 = vsel %vm781, %v1187, 0
      %v1227 = vsel %vm781, %v1189, 0
      %v1230 = vsel %vm781, %v1191, 0
      %1232 = vmatprep.subr.mxu0 0.0
      %1233 = vmatpush1.msra.mxu0 %v1192
      %1234 = vmatprep.subr.mxu0 0.0
      %1235 = vmatpush1.msra.mxu0 %v1193
      %1236 = vmatprep.subr.mxu0 0.0
      %1237 = vmatpush1.msra.mxu0 %v1194
      %1238 = vmatprep.subr.mxu0 0.0
      %1239 = vmatpush1.msra.mxu0 %v1195
      %1240 = vmatprep.subr.mxu0 0.0
      %1241 = vmatpush1.msra.mxu0 %v1196
      %1242 = vmatprep.subr.mxu0 0.0
      %1243 = vmatpush1.msra.mxu0 %v1197
      %1244 = vmatprep.subr.mxu0 0.0
      %1245 = vmatpush1.msra.mxu0 %v1198
      %1246 = vmatprep.subr.mxu0 0.0
      %1247 = vmatpush1.msra.mxu0 %v1199
      %1248 = vmatprep.subr.mxu0 0.0
      %1249 = vmatpush1.msra.mxu0 %v1200
      %1250 = vmatprep.subr.mxu0 0.0
      %1251 = vmatpush1.msra.mxu0 %v1201
      %1252 = vmatprep.subr.mxu0 0.0
      %1253 = vmatpush1.msra.mxu0 %v1202
      %1254 = vmatprep.subr.mxu0 0.0
      %1255 = vmatpush1.msra.mxu0 %v1203
      %1256 = vmatprep.subr.mxu0 0.0
      %1257 = vmatpush1.msra.mxu0 %v1204
      %1258 = vmatprep.subr.mxu0 0.0
      %1259 = vmatpush1.msra.mxu0 %v1205
      %1260 = vmatprep.subr.mxu0 0.0
      %1261 = vmatpush1.msra.mxu0 %v1206
      %1262 = vmatprep.subr.mxu0 0.0
      %1263 = vmatpush1.msra.mxu0 %v1207
      %1264 = vmatprep.subr.mxu0 0.0
      %1265 = vmatpush1.msra.mxu0 %v1208
      %1266 = vmatprep.subr.mxu0 0.0
      %1267 = vmatpush1.msra.mxu0 %v1209
      %1268 = vmatprep.subr.mxu0 0.0
      %1269 = vmatpush1.msra.mxu0 %v1210
      %1270 = vmatprep.subr.mxu0 0.0
      %1271 = vmatpush1.msra.mxu0 %v1211
      %1272 = vmatprep.subr.mxu0 0.0
      %1273 = vmatpush1.msra.mxu0 %v1212
      %1274 = vmatprep.subr.mxu0 0.0
      %1275 = vmatpush1.msra.mxu0 %v1213
      %1276 = vmatprep.subr.mxu0 0.0
      %1277 = vmatpush1.msra.mxu0 %v1214
      %1278 = vmatprep.subr.mxu0 0.0
      %1279 = vmatpush1.msra.mxu0 %v1215
      %1280 = vmatprep.subr.mxu0 0.0
      %1281 = vmatpush1.msra.mxu0 %v1216
      %1282 = vmatprep.subr.mxu0 0.0
      %1283 = vmatpush1.msra.mxu0 %v1217
      %1284 = vmatprep.subr.mxu0 0.0
      %1285 = vmatpush1.msra.mxu0 %v1218
      %1286 = vmatprep.subr.mxu0 0.0
      %1287 = vmatpush1.msra.mxu0 %v1219
      %1288 = vmatprep.subr.mxu0 0.0
      %1289 = vmatpush1.msra.mxu0 0.0
      %1290 = vmatprep.subr.mxu0 0.0
      %1291 = vmatpush1.msra.mxu0 0.0
      %1292 = vmatprep.subr.mxu0 0.0
      %1293 = vmatpush1.msra.mxu0 0.0
      %1294 = vmatprep.subr.mxu0 0.0
      %1295 = vmatpush1.msra.mxu0 0.0
      %1296 = vmatprep.mubr.f32.mxu0 %v1221
      %1297 = vmatmul.mubr.f32.gmra.mrb[0].mxu0 %v1184
      %v1298 = vpop.f32.mrb[0].mxu0
      %v1299 = vadd.f32 0.0, %v1298
      %v1300 = vpop.f32.mrb[0].mxu0
      %1301 = vmatprep.mubr.f32.mxu0 %v1224
      %1302 = vmatmul.mubr.f32.gmra.mrb[0].mxu0 %v1186
      %v1303 = vpop.f32.mrb[0].mxu0
      %v1304 = vadd.f32 0.0, %v1303
      %v1305 = vpop.f32.mrb[0].mxu0
      %1306 = vmatprep.mubr.f32.mxu0 %v1227
      %1307 = vmatmul.mubr.f32.gmra.mrb[0].mxu0 %v1188
      %v1308 = vpop.f32.mrb[0].mxu0
      %v1309 = vadd.f32 0.0, %v1308
      %v1310 = vpop.f32.mrb[0].mxu0
      %1311 = vmatprep.mubr.f32.mxu0 %v1230
      %1312 = vmatmul.mubr.f32.gmra.mrb[0].mxu0 %v1190
      %v1313 = vpop.f32.mrb[0].mxu0
      %v1314 = vadd.f32 0.0, %v1313
      %v1315 = vpop.f32.mrb[0].mxu0
      %1316 = vdwg.mxu0
      %v1318 = vsel %vm781, %v1164, 0
      %v1321 = vsel %vm781, %v1170, 0
      %v1324 = vsel %vm781, %v1176, 0
      %v1327 = vsel %vm781, %v1182, 0
      %1329 = vmatprep.subr.mxu0 0.0
      %1330 = vmatpush1.msra.mxu0 %v1192
      %1331 = vmatprep.subr.mxu0 0.0
      %1332 = vmatpush1.msra.mxu0 %v1193
      %1333 = vmatprep.subr.mxu0 0.0
      %1334 = vmatpush1.msra.mxu0 %v1194
      %1335 = vmatprep.subr.mxu0 0.0
      %1336 = vmatpush1.msra.mxu0 %v1195
      %1337 = vmatprep.subr.mxu0 0.0
      %1338 = vmatpush1.msra.mxu0 %v1196
      %1339 = vmatprep.subr.mxu0 0.0
      %1340 = vmatpush1.msra.mxu0 %v1197
      %1341 = vmatprep.subr.mxu0 0.0
      %1342 = vmatpush1.msra.mxu0 %v1198
      %1343 = vmatprep.subr.mxu0 0.0
      %1344 = vmatpush1.msra.mxu0 %v1199
      %1345 = vmatprep.subr.mxu0 0.0
      %1346 = vmatpush1.msra.mxu0 %v1200
      %1347 = vmatprep.subr.mxu0 0.0
      %1348 = vmatpush1.msra.mxu0 %v1201
      %1349 = vmatprep.subr.mxu0 0.0
      %1350 = vmatpush1.msra.mxu0 %v1202
      %1351 = vmatprep.subr.mxu0 0.0
      %1352 = vmatpush1.msra.mxu0 %v1203
      %1353 = vmatprep.subr.mxu0 0.0
      %1354 = vmatpush1.msra.mxu0 %v1204
      %1355 = vmatprep.subr.mxu0 0.0
      %1356 = vmatpush1.msra.mxu0 %v1205
      %1357 = vmatprep.subr.mxu0 0.0
      %1358 = vmatpush1.msra.mxu0 %v1206
      %1359 = vmatprep.subr.mxu0 0.0
      %1360 = vmatpush1.msra.mxu0 %v1207
      %1361 = vmatprep.subr.mxu0 0.0
      %1362 = vmatpush1.msra.mxu0 %v1208
      %1363 = vmatprep.subr.mxu0 0.0
      %1364 = vmatpush1.msra.mxu0 %v1209
      %1365 = vmatprep.subr.mxu0 0.0
      %1366 = vmatpush1.msra.mxu0 %v1210
      %1367 = vmatprep.subr.mxu0 0.0
      %1368 = vmatpush1.msra.mxu0 %v1211
      %1369 = vmatprep.subr.mxu0 0.0
      %1370 = vmatpush1.msra.mxu0 %v1212
      %1371 = vmatprep.subr.mxu0 0.0
      %1372 = vmatpush1.msra.mxu0 %v1213
      %1373 = vmatprep.subr.mxu0 0.0
      %1374 = vmatpush1.msra.mxu0 %v1214
      %1375 = vmatprep.subr.mxu0 0.0
      %1376 = vmatpush1.msra.mxu0 %v1215
      %1377 = vmatprep.subr.mxu0 0.0
      %1378 = vmatpush1.msra.mxu0 %v1216
      %1379 = vmatprep.subr.mxu0 0.0
      %1380 = vmatpush1.msra.mxu0 %v1217
      %1381 = vmatprep.subr.mxu0 0.0
      %1382 = vmatpush1.msra.mxu0 %v1218
      %1383 = vmatprep.subr.mxu0 0.0
      %1384 = vmatpush1.msra.mxu0 %v1219
      %1385 = vmatprep.subr.mxu0 0.0
      %1386 = vmatpush1.msra.mxu0 0.0
      %1387 = vmatprep.subr.mxu0 0.0
      %1388 = vmatpush1.msra.mxu0 0.0
      %1389 = vmatprep.subr.mxu0 0.0
      %1390 = vmatpush1.msra.mxu0 0.0
      %1391 = vmatprep.subr.mxu0 0.0
      %1392 = vmatpush1.msra.mxu0 0.0
      %1393 = vmatprep.mubr.f32.mxu0 %v1318
      %1394 = vmatmul.mubr.f32.gmra.mrb[0].mxu0 %v1162
      %v1395 = vpop.f32.mrb[0].mxu0
      %v1396 = vadd.f32 0.0, %v1395
      %v1397 = vpop.f32.mrb[0].mxu0
      %1398 = vmatprep.mubr.f32.mxu0 %v1321
      %1399 = vmatmul.mubr.f32.gmra.mrb[0].mxu0 %v1168
      %v1400 = vpop.f32.mrb[0].mxu0
      %v1401 = vadd.f32 0.0, %v1400
      %v1402 = vpop.f32.mrb[0].mxu0
      %1403 = vmatprep.mubr.f32.mxu0 %v1324
      %1404 = vmatmul.mubr.f32.gmra.mrb[0].mxu0 %v1174
      %v1405 = vpop.f32.mrb[0].mxu0
      %v1406 = vadd.f32 0.0, %v1405
      %v1407 = vpop.f32.mrb[0].mxu0
      %1408 = vmatprep.mubr.f32.mxu0 %v1327
      %1409 = vmatmul.mubr.f32.gmra.mrb[0].mxu0 %v1180
      %v1410 = vpop.f32.mrb[0].mxu0
      %v1411 = vadd.f32 0.0, %v1410
      %v1412 = vpop.f32.mrb[0].mxu0
      %1413 = vdwg.mxu0
      %v1414 = vrcp.pop %v1396
      %v1415 = vmul.f32 %v1299, %v1414
      %v1416 = vrcp.pop %v1401
      %v1417 = vmul.f32 %v1304, %v1416
      %v1418 = vrcp.pop %v1406
      %v1419 = vmul.f32 %v1309, %v1418
      %v1420 = vrcp.pop %v1411
      %v1421 = vmul.f32 %v1314, %v1420
      %v1422 = vpack.c.bf16 %v1417, %v1415
      %v1423 = vpack.c.bf16 %v1421, %v1419
      %v1424 = vld [vmem:[%s2] sm:$0xf]
      %v1425 = vld [vmem:[%s2 + $0x4] sm:$0xf]
      %v1426 = vld [vmem:[%s2 + $0x8] sm:$0xf]
      %v1427 = vld [vmem:[%s2 + $0xc] sm:$0xf]
      %v1432 = vunpack.c.l.b16 %v1424
      %v1433 = vunpack.c.l.b16 %v1425
      %v1434 = vunpack.c.l.b16 %v1426
      %v1435 = vunpack.c.l.b16 %v1427
      %v1436 = vpack.c.b16 %v1433, %v1432
      %v1437 = vpack.c.b16 %v1435, %v1434
      %v1441 = vsel %vm313, %v1422, 0
      %v1444 = vsel %vm313, %v1423, 0
      %1446 = vmatprep.subr.bf16.mxu0 0
      %1447 = vmatpush1.bf16.msra.mxu0 %v1436
      %1448 = vmatprep.subr.bf16.mxu0 0
      %1449 = vmatpush1.bf16.msra.mxu0 %v1437
      %1450 = vmatprep.subr.bf16.mxu0 0
      %1451 = vmatpush1.bf16.msra.mxu0 0
      %1452 = vmatprep.subr.bf16.mxu0 0
      %1453 = vmatpush1.bf16.msra.mxu0 0
      %1454 = vmatprep.subr.bf16.mxu0 0
      %1455 = vmatpush1.bf16.msra.mxu0 0
      %1456 = vmatprep.subr.bf16.mxu0 0
      %1457 = vmatpush1.bf16.msra.mxu0 0
      %1458 = vmatprep.subr.bf16.mxu0 0
      %1459 = vmatpush1.bf16.msra.mxu0 0
      %1460 = vmatprep.subr.bf16.mxu0 0
      %1461 = vmatpush1.bf16.msra.mxu0 0
      %1462 = vmatprep.subr.bf16.mxu0 0
      %1463 = vmatpush1.bf16.msra.mxu0 0
      %1464 = vmatprep.subr.bf16.mxu0 0
      %1465 = vmatpush1.bf16.msra.mxu0 0
      %1466 = vmatprep.subr.bf16.mxu0 0
      %1467 = vmatpush1.bf16.msra.mxu0 0
      %1468 = vmatprep.subr.bf16.mxu0 0
      %1469 = vmatpush1.bf16.msra.mxu0 0
      %1470 = vmatprep.subr.bf16.mxu0 0
      %1471 = vmatpush1.bf16.msra.mxu0 0
      %1472 = vmatprep.subr.bf16.mxu0 0
      %1473 = vmatpush1.bf16.msra.mxu0 0
      %1474 = vmatprep.subr.bf16.mxu0 0
      %1475 = vmatpush1.bf16.msra.mxu0 0
      %1476 = vmatprep.subr.bf16.mxu0 0
      %1477 = vmatpush1.bf16.msra.mxu0 0
      %1478 = vmatprep.mubr.bf16.mxu0 0
      %1479 = vmatmul.mubr.bf16.gmra.mrb[0].mxu0 %v1441
      %v1480 = vpop.f32.mrb[0].mxu0
      %v1481 = vadd.f32 0.0, %v1480
      %v1482 = vpop.f32.mrb[0].mxu0
      %v1483 = vpop.f32.mrb[0].mxu0
      %v1484 = vadd.f32 0.0, %v1483
      %v1485 = vpop.f32.mrb[0].mxu0
      %1486 = vmatprep.mubr.bf16.mxu0 0
      %1487 = vmatmul.mubr.bf16.gmra.mrb[0].mxu0 %v1444
      %v1488 = vpop.f32.mrb[0].mxu0
      %v1489 = vadd.f32 0.0, %v1488
      %v1490 = vpop.f32.mrb[0].mxu0
      %v1491 = vpop.f32.mrb[0].mxu0
      %v1492 = vadd.f32 0.0, %v1491
      %v1493 = vpop.f32.mrb[0].mxu0
      %1494 = vdwg.mxu0
      %1495 = vst.msk [vmem:[%s280] sm:$0xff] %vm313, %v1481
      %1496 = vst.msk [vmem:[%s280 + $0x8] sm:$0xff] %vm313, %v1484
      %1497 = vst.msk [vmem:[%s280 + $0x10] sm:$0xff] %vm313, %v1489
      %1498 = vst.msk [vmem:[%s280 + $0x18] sm:$0xff] %vm313, %v1492
      %s1499 = smul.u32 4, %s18
      %p1500 = scmp.lt.s32.totalorder %s1499, 7
      %s1501 = scalar_select %p1500, %s1499, 7
      %s1502 = smul.addr %s1501, 8
      %s1503 = scalar_lea.vmem %s7, %s1502
      // Predicated region
      $region49: #{tpu_custom_call.1} parent=47 // pred_check
        %p1504 = pneg %p188
      $region50: #{tpu_custom_call.1} parent=47 // pred_check_branch
        %1506 = sbr.rel (%p1504) target = $region52
      $region51: #{tpu_custom_call.1} parent=47 // pred_region
        %s1507 = smul.u32 4, %s18
      $region52: #{tpu_custom_call.1} parent=47 // pred_fallthru
        _
    $region48: #{tpu_custom_call.1} parent=5 // pred_fallthru
      _
    %p1508 = scmp.le.s32.totalorder 2, %s13
    // Predicated region
    $region53: #{tpu_custom_call.1} parent=5 // pred_check
      %p1509 = pneg %p1508
    $region54: #{tpu_custom_call.1} parent=5 // pred_check_branch
      %1511 = sbr.rel (%p1509) target = $region56
    $region55: #{tpu_custom_call.1} parent=5 // pred_region
      %s1512 = ssub.s32 %s13, 2
      // Predicated region
      $region57: #{tpu_custom_call.1} parent=55 // pred_check
        %p1513 = pneg %p194
      $region58: #{tpu_custom_call.1} parent=55 // pred_check_branch
        %1515 = sbr.rel (%p1513) target = $region60
      $region59: #{tpu_custom_call.1} parent=55 // pred_region
        %s1516 = smul.u32 4, %s19
        %p1517 = scmp.lt.s32.totalorder %s1516, 7
        %s1518 = scalar_select %p1517, %s1516, 7
        %s1519 = smul.addr %s1518, 8
        %s1520 = scalar_lea.vmem %s7, %s1519
      $region60: #{tpu_custom_call.1} parent=55 // pred_fallthru
        _
    $region56: #{tpu_custom_call.1} parent=5 // pred_fallthru
      _
  $region6: #{tpu_custom_call.1} parent=0 // loop_footer
    %s17 = sadd.s32 1, %s13
  $region7: #{tpu_custom_call.1} parent=0 // loop_footer_branch
    %12 = sbr.rel target = $region3
  $region8: #{tpu_custom_call.1} parent=0 // loop_exit
    _

</llo_original>
